<compile_context>
chip_gen: v7x
topology: tpu7x:2x2x1
jax: 0.10.0
libtpu: 0.0.40
codegen_flags: <defaults>
</compile_context>

<pallas_src>
import jax
import jax.numpy as jnp
import numpy as np
from jax import lax
from jax.experimental import pallas as pl
from jax.experimental.pallas import tpu as pltpu

N_BATCH = 2
C_IN = 256
C_MID = 2
H = W = 19
HW = H * W               # 361
HWP = 384                # HW rounded up to a lane-aligned multiple of 128 (FC weight rows)
FLAT = C_MID * HW        # 722
OUT = HW + 1             # 362
EPS = 1e-5


def policy_head_kernel(x_ref, wc_ref, gb_ref, wf_ref, fb_ref, out_ref, lhs_ref):
    """Fused conv1x1 + batchnorm(train stats) + relu + fc.

    x_ref   : (N*C_IN, HW)        f32    natural NCHW layout, contiguous reshape only
    wc_ref  : (C_MID, C_IN)       bf16   conv weight (1x1 kernel squeezed)
    gb_ref  : (C_MID, 2)          f32    column 0 = bn gamma, column 1 = bn beta
    wf_ref  : (C_MID*HWP, OUT)    bf16   fc weight, channel-major rows, zero rows at pads
    fb_ref  : (1, OUT)            f32    fc bias
    out_ref : (N, OUT)            f32
    lhs_ref : (N, C_MID*HWP)      bf16   tiny scratch staging the channel-major FC lhs
    """
    n_batch = out_ref.shape[0]
    c_mid, c_in = wc_ref.shape
    hw = x_ref.shape[1]
    hwp = lhs_ref.shape[1] // c_mid

    wc = wc_ref[...]                                                    # (C_MID, C_IN) bf16

    # ---- 1x1 conv straight off the natural-NCHW input (cast to bf16 in-kernel) ----
    ys = []
    for n in range(n_batch):
        xn = x_ref[n * c_in:(n + 1) * c_in, :].astype(jnp.bfloat16)     # (C_IN, HW)
        ys.append(jnp.dot(wc, xn, preferred_element_type=jnp.float32))  # (C_MID, HW) f32

    # ---- BatchNorm2d, training-mode batch stats (biased variance, eps=1e-5) ----
    y_sum = ys[0]
    y_sq = ys[0] * ys[0]
    for n in range(1, n_batch):
        y_sum = y_sum + ys[n]
        y_sq = y_sq + ys[n] * ys[n]
    inv_count = 1.0 / float(n_batch * hw)
    mean = jnp.sum(y_sum, axis=1, keepdims=True) * inv_count            # (C_MID, 1)
    ex2 = jnp.sum(y_sq, axis=1, keepdims=True) * inv_count
    var = jnp.maximum(ex2 - mean * mean, 0.0)                           # guard single-pass var
    gamma = gb_ref[:, 0:1]
    beta = gb_ref[:, 1:2]
    scale = gamma * lax.rsqrt(var + EPS)                                # (C_MID, 1)
    shift = beta - mean * scale

    # ---- normalize + ReLU; stage the channel-major FC lhs in a tiny bf16 scratch ----
    # PyTorch flatten is channel-major: lhs[n, c*HWP + hw] = z[n, c, hw].  The scratch is
    # zeroed so the pad lanes [hw, hwp) are exactly 0 regardless of the FC-weight packing.
    lhs_ref[...] = jnp.zeros_like(lhs_ref)
    for n in range(n_batch):
        zn = jnp.maximum(ys[n] * scale + shift, 0.0).astype(jnp.bfloat16)   # (C_MID, HW)
        for c in range(c_mid):
            lhs_ref[n:n + 1, c * hwp:c * hwp + hw] = zn[c:c + 1, :]

    # ---- fused FC: one (N, C_MID*HWP) @ (C_MID*HWP, OUT) MXU matmul + bias ----
    out_ref[...] = (jnp.dot(lhs_ref[...], wf_ref[...],
                            preferred_element_type=jnp.float32) + fb_ref[...])


def _full_spec(shape):
    # whole-array block (last two dims equal the full array dims -> always legal)
    nd = len(shape)
    return pl.BlockSpec(shape, lambda i, _nd=nd: (0,) * _nd)


def prepare_params(params):
    """One-time weight re-packing; call once at init and reuse across forward calls."""
    conv_w, conv_b, bn_g, bn_b, fc_w, fc_b = params
    del conv_b  # cancelled exactly by the training-mode BN batch-mean subtraction

    wc = conv_w.reshape(C_MID, C_IN).astype(jnp.bfloat16)               # (2, 256)
    gb = jnp.stack([bn_g, bn_b], axis=1).astype(jnp.float32)            # (C_MID, 2)

    # FC weight: transpose, split per conv channel, zero-pad rows 361->384, concat.
    # TODO(synk): optionally narrow wf to int8 (v5e/v6e) / fp8 (v7x) with per-column scales
    # to halve the dominant DMA; accuracy tradeoff is a model-level decision.
    wfT = fc_w.T                                                        # (722, 362)
    blocks = []
    for c in range(C_MID):
        blk = wfT[c * HW:(c + 1) * HW, :]                               # (361, 362)
        blocks.append(jnp.pad(blk, ((0, HWP - HW), (0, 0))))            # (384, 362), zero rows
    wf = jnp.concatenate(blocks, axis=0).astype(jnp.bfloat16)           # (768, 362)

    fb = fc_b.reshape(1, OUT).astype(jnp.float32)                       # (1, 362)
    return wc, gb, wf, fb


@jax.jit
def policy_head_forward(x_nchw, wc, gb, wf, fb):
    """x_nchw: (N, 256, 19, 19) float32 -> (N, 362) float32."""
    n = x_nchw.shape[0]
    # Contiguous NCHW view only — no transpose / pad / cast HBM pass.
    x2 = x_nchw.reshape(n * C_IN, HW)

    return pl.pallas_call(
        policy_head_kernel,
        out_shape=jax.ShapeDtypeStruct((n, OUT), jnp.float32),
        grid=(1,),
        in_specs=[
            _full_spec((n * C_IN, HW)),
            _full_spec((C_MID, C_IN)),
            _full_spec((C_MID, 2)),
            _full_spec((C_MID * HWP, OUT)),
            _full_spec((1, OUT)),
        ],
        out_specs=_full_spec((n, OUT)),
        scratch_shapes=[pltpu.VMEM((n, C_MID * HWP), jnp.bfloat16)],
        compiler_params=pltpu.CompilerParams(
            dimension_semantics=("arbitrary",),
            vmem_limit_bytes=16 << 20,   # working set ~3 MiB; safe on v5e/v6e/v7x
        ),
    )(x2, wc, gb, wf, fb)


def ref_forward(x, conv_w, conv_b, bn_g, bn_b, fc_w, fc_b):
    """Pure-JAX f32 replica of the PyTorch forward (NCHW, training-mode BN)."""
    wc = conv_w.reshape(C_MID, C_IN)
    y = (jnp.einsum('nchw,oc->nohw', x, wc, precision=lax.Precision.HIGHEST)
         + conv_b[None, :, None, None])
    mean = jnp.mean(y, axis=(0, 2, 3), keepdims=True)
    var = jnp.var(y, axis=(0, 2, 3), keepdims=True)   # biased, as PyTorch normalizes with
    yn = (y - mean) * lax.rsqrt(var + EPS) * bn_g[None, :, None, None] + bn_b[None, :, None, None]
    z = jnp.maximum(yn, 0.0)
    flat = z.reshape(x.shape[0], -1)                  # channel-major flatten (NCHW view)
    return jnp.dot(flat, fc_w.T, precision=lax.Precision.HIGHEST) + fc_b


if __name__ == "__main__":
    key = jax.random.PRNGKey(0)
    k1, k2, k3, k4, k5, k6, k7 = jax.random.split(key, 7)

    # deterministic synthetic parameters (shapes dictated by the module __init__)
    conv_w = jax.random.normal(k1, (C_MID, C_IN, 1, 1), jnp.float32) * 0.05
    conv_b = jax.random.normal(k2, (C_MID,), jnp.float32) * 0.05
    bn_g = 1.0 + 0.1 * jax.random.normal(k3, (C_MID,), jnp.float32)
    bn_b = 0.1 * jax.random.normal(k4, (C_MID,), jnp.float32)
    fc_w = jax.random.normal(k5, (OUT, FLAT), jnp.float32) * 0.05
    fc_b = jax.random.normal(k6, (OUT,), jnp.float32) * 0.05

    x = jax.random.normal(k7, (N_BATCH, C_IN, H, W), jnp.float32)

    params = (conv_w, conv_b, bn_g, bn_b, fc_w, fc_b)
    packed = prepare_params(params)          # one-time weight prep (reused across calls)

    out = policy_head_forward(x, *packed)
    out = jax.block_until_ready(out)
    assert out.shape == (N_BATCH, OUT)

    ref = ref_forward(x, *params)
    # bf16 matmul operands with f32 accumulation -> estimated worst-case |err| ~1e-2
    np.testing.assert_allclose(np.asarray(out), np.asarray(ref), rtol=2e-2, atol=2e-2)

    print("KERNEL_OK")
</pallas_src>

<mosaic_0001>
module attributes {stable_mosaic.version = 11 : i64} {
  func.func @policy_head_kernel(%arg0: i32, %arg1: memref<512x361xf32, #tpu.memory_space<vmem>>, %arg2: memref<2x256xbf16, #tpu.memory_space<vmem>>, %arg3: memref<2x2xf32, #tpu.memory_space<vmem>>, %arg4: memref<768x362xbf16, #tpu.memory_space<vmem>>, %arg5: memref<1x362xf32, #tpu.memory_space<vmem>>, %arg6: memref<2x362xf32, #tpu.memory_space<vmem>>, %arg7: memref<2x768xbf16, #tpu.memory_space<vmem>>) attributes {dimension_semantics = [#tpu.dimension_semantics<arbitrary>], iteration_bounds = array<i64: 1>, scalar_prefetch = 0 : i64, scratch_operands = 1 : i64, tpu.core_type = #tpu.core_type<tc>, window_params = [{pipeline_mode = #tpu.pipeline_mode<synchronous>, transform_indices = @transform_0, window_bounds = array<i64: 512, 361>}, {pipeline_mode = #tpu.pipeline_mode<synchronous>, transform_indices = @transform_1, window_bounds = array<i64: 2, 256>}, {pipeline_mode = #tpu.pipeline_mode<synchronous>, transform_indices = @transform_2, window_bounds = array<i64: 2, 2>}, {pipeline_mode = #tpu.pipeline_mode<synchronous>, transform_indices = @transform_3, window_bounds = array<i64: 768, 362>}, {pipeline_mode = #tpu.pipeline_mode<synchronous>, transform_indices = @transform_4, window_bounds = array<i64: 1, 362>}, {pipeline_mode = #tpu.pipeline_mode<synchronous>, transform_indices = @transform_5, window_bounds = array<i64: 2, 362>}]} {
    %c0 = arith.constant 0 : index
    %c0_0 = arith.constant 0 : index
    %0 = vector.load %arg2[%c0, %c0_0] : memref<2x256xbf16, #tpu.memory_space<vmem>>, vector<2x256xbf16>
    %c0_1 = arith.constant 0 : index
    %c0_2 = arith.constant 0 : index
    %1 = vector.load %arg1[%c0_1, %c0_2] : memref<512x361xf32, #tpu.memory_space<vmem>>, vector<256x361xf32>
    %2 = arith.truncf %1 : vector<256x361xf32> to vector<256x361xbf16>
    %cst = arith.constant dense<0.000000e+00> : vector<2x361xf32>
    %3 = tpu.matmul %0, %2, %cst {dimension_numbers = #tpu.dot_dimension_numbers<[1], [0], [0], [1], [0, 0, 1, 1], [], []>} : vector<2x256xbf16>, vector<256x361xbf16>, vector<2x361xf32> -> vector<2x361xf32>
    %c256 = arith.constant 256 : index
    %c0_3 = arith.constant 0 : index
    %4 = vector.load %arg1[%c256, %c0_3] : memref<512x361xf32, #tpu.memory_space<vmem>>, vector<256x361xf32>
    %5 = arith.truncf %4 : vector<256x361xf32> to vector<256x361xbf16>
    %cst_4 = arith.constant dense<0.000000e+00> : vector<2x361xf32>
    %6 = tpu.matmul %0, %5, %cst_4 {dimension_numbers = #tpu.dot_dimension_numbers<[1], [0], [0], [1], [0, 0, 1, 1], [], []>} : vector<2x256xbf16>, vector<256x361xbf16>, vector<2x361xf32> -> vector<2x361xf32>
    %7 = arith.mulf %3, %3 : vector<2x361xf32>
    %8 = arith.addf %3, %6 : vector<2x361xf32>
    %9 = arith.mulf %6, %6 : vector<2x361xf32>
    %10 = arith.addf %7, %9 : vector<2x361xf32>
    %cst_5 = arith.constant dense<0.000000e+00> : vector<2xf32>
    %11 = vector.multi_reduction <add>, %8, %cst_5 [1] : vector<2x361xf32> to vector<2xf32>
    %12 = vector.shape_cast %11 : vector<2xf32> to vector<2x1xf32>
    %cst_6 = arith.constant 0.00138504151 : f32
    %13 = vector.broadcast %cst_6 : f32 to vector<2x1xf32>
    %14 = arith.mulf %12, %13 : vector<2x1xf32>
    %cst_7 = arith.constant dense<0.000000e+00> : vector<2xf32>
    %15 = vector.multi_reduction <add>, %10, %cst_7 [1] : vector<2x361xf32> to vector<2xf32>
    %16 = vector.shape_cast %15 : vector<2xf32> to vector<2x1xf32>
    %cst_8 = arith.constant 0.00138504151 : f32
    %17 = vector.broadcast %cst_8 : f32 to vector<2x1xf32>
    %18 = arith.mulf %16, %17 : vector<2x1xf32>
    %19 = arith.mulf %14, %14 : vector<2x1xf32>
    %20 = arith.subf %18, %19 : vector<2x1xf32>
    %cst_9 = arith.constant 0.000000e+00 : f32
    %21 = vector.broadcast %cst_9 : f32 to vector<2x1xf32>
    %22 = arith.maximumf %20, %21 : vector<2x1xf32>
    %c0_10 = arith.constant 0 : index
    %c0_11 = arith.constant 0 : index
    %23 = vector.load %arg3[%c0_10, %c0_11] : memref<2x2xf32, #tpu.memory_space<vmem>>, vector<2x1xf32>
    %c0_12 = arith.constant 0 : index
    %c1 = arith.constant 1 : index
    %24 = vector.load %arg3[%c0_12, %c1] : memref<2x2xf32, #tpu.memory_space<vmem>>, vector<2x1xf32>
    %cst_13 = arith.constant 9.99999974E-6 : f32
    %25 = vector.broadcast %cst_13 : f32 to vector<2x1xf32>
    %26 = arith.addf %22, %25 : vector<2x1xf32>
    %27 = math.rsqrt %26 : vector<2x1xf32>
    %28 = arith.mulf %23, %27 : vector<2x1xf32>
    %29 = arith.mulf %14, %28 : vector<2x1xf32>
    %30 = arith.subf %24, %29 : vector<2x1xf32>
    %cst_14 = arith.constant 0.000000e+00 : bf16
    %31 = vector.broadcast %cst_14 : bf16 to vector<2x768xbf16>
    %c0_15 = arith.constant 0 : index
    %c0_16 = arith.constant 0 : index
    %32 = vector.load %arg7[%c0_15, %c0_16] : memref<2x768xbf16, #tpu.memory_space<vmem>>, vector<2x768xbf16>
    tpu.vector_store %arg7[%c0_15, %c0_16], %31 {strides = array<i32>} : memref<2x768xbf16, #tpu.memory_space<vmem>>, vector<2x768xbf16>,
    %33 = vector.broadcast %28 : vector<2x1xf32> to vector<2x361xf32>
    %34 = arith.mulf %3, %33 : vector<2x361xf32>
    %35 = vector.broadcast %30 : vector<2x1xf32> to vector<2x361xf32>
    %36 = arith.addf %34, %35 : vector<2x361xf32>
    %cst_17 = arith.constant 0.000000e+00 : f32
    %37 = vector.broadcast %cst_17 : f32 to vector<2x361xf32>
    %38 = arith.maximumf %36, %37 : vector<2x361xf32>
    %39 = arith.truncf %38 : vector<2x361xf32> to vector<2x361xbf16>
    %40 = vector.extract_strided_slice %39 {offsets = [0, 0], sizes = [1, 361], strides = [1, 1]} : vector<2x361xbf16> to vector<1x361xbf16>
    %c0_18 = arith.constant 0 : index
    %c0_19 = arith.constant 0 : index
    %41 = vector.load %arg7[%c0_18, %c0_19] : memref<2x768xbf16, #tpu.memory_space<vmem>>, vector<1x361xbf16>
    tpu.vector_store %arg7[%c0_18, %c0_19], %40 {strides = array<i32>} : memref<2x768xbf16, #tpu.memory_space<vmem>>, vector<1x361xbf16>,
    %42 = vector.extract_strided_slice %39 {offsets = [1, 0], sizes = [1, 361], strides = [1, 1]} : vector<2x361xbf16> to vector<1x361xbf16>
    %c0_20 = arith.constant 0 : index
    %c384 = arith.constant 384 : index
    %43 = vector.load %arg7[%c0_20, %c384] : memref<2x768xbf16, #tpu.memory_space<vmem>>, vector<1x361xbf16>
    tpu.vector_store %arg7[%c0_20, %c384], %42 {strides = array<i32>} : memref<2x768xbf16, #tpu.memory_space<vmem>>, vector<1x361xbf16>,
    %44 = vector.broadcast %28 : vector<2x1xf32> to vector<2x361xf32>
    %45 = arith.mulf %6, %44 : vector<2x361xf32>
    %46 = vector.broadcast %30 : vector<2x1xf32> to vector<2x361xf32>
    %47 = arith.addf %45, %46 : vector<2x361xf32>
    %cst_21 = arith.constant 0.000000e+00 : f32
    %48 = vector.broadcast %cst_21 : f32 to vector<2x361xf32>
    %49 = arith.maximumf %47, %48 : vector<2x361xf32>
    %50 = arith.truncf %49 : vector<2x361xf32> to vector<2x361xbf16>
    %51 = vector.extract_strided_slice %50 {offsets = [0, 0], sizes = [1, 361], strides = [1, 1]} : vector<2x361xbf16> to vector<1x361xbf16>
    %c1_22 = arith.constant 1 : index
    %c0_23 = arith.constant 0 : index
    %52 = vector.load %arg7[%c1_22, %c0_23] : memref<2x768xbf16, #tpu.memory_space<vmem>>, vector<1x361xbf16>
    tpu.vector_store %arg7[%c1_22, %c0_23], %51 {strides = array<i32>} : memref<2x768xbf16, #tpu.memory_space<vmem>>, vector<1x361xbf16>,
    %53 = vector.extract_strided_slice %50 {offsets = [1, 0], sizes = [1, 361], strides = [1, 1]} : vector<2x361xbf16> to vector<1x361xbf16>
    %c1_24 = arith.constant 1 : index
    %c384_25 = arith.constant 384 : index
    %54 = vector.load %arg7[%c1_24, %c384_25] : memref<2x768xbf16, #tpu.memory_space<vmem>>, vector<1x361xbf16>
    tpu.vector_store %arg7[%c1_24, %c384_25], %53 {strides = array<i32>} : memref<2x768xbf16, #tpu.memory_space<vmem>>, vector<1x361xbf16>,
    %c0_26 = arith.constant 0 : index
    %c0_27 = arith.constant 0 : index
    %55 = vector.load %arg7[%c0_26, %c0_27] : memref<2x768xbf16, #tpu.memory_space<vmem>>, vector<2x768xbf16>
    %c0_28 = arith.constant 0 : index
    %c0_29 = arith.constant 0 : index
    %56 = vector.load %arg4[%c0_28, %c0_29] : memref<768x362xbf16, #tpu.memory_space<vmem>>, vector<768x362xbf16>
    %cst_30 = arith.constant dense<0.000000e+00> : vector<2x362xf32>
    %57 = tpu.matmul %55, %56, %cst_30 {dimension_numbers = #tpu.dot_dimension_numbers<[1], [0], [0], [1], [0, 0, 1, 1], [], []>} : vector<2x768xbf16>, vector<768x362xbf16>, vector<2x362xf32> -> vector<2x362xf32>
    %c0_31 = arith.constant 0 : index
    %c0_32 = arith.constant 0 : index
    %58 = vector.load %arg5[%c0_31, %c0_32] : memref<1x362xf32, #tpu.memory_space<vmem>>, vector<1x362xf32>
    %59 = vector.broadcast %58 : vector<1x362xf32> to vector<2x362xf32>
    %60 = arith.addf %57, %59 : vector<2x362xf32>
    %c0_33 = arith.constant 0 : index
    %c0_34 = arith.constant 0 : index
    %61 = vector.load %arg6[%c0_33, %c0_34] : memref<2x362xf32, #tpu.memory_space<vmem>>, vector<2x362xf32>
    tpu.vector_store %arg6[%c0_33, %c0_34], %60 {strides = array<i32>} : memref<2x362xf32, #tpu.memory_space<vmem>>, vector<2x362xf32>,
    return
  }
  func.func @transform_0(%arg0: i32) -> (i32, i32) {
    %c0_i32 = arith.constant 0 : i32
    %c0_i32_0 = arith.constant 0 : i32
    %c0_i32_1 = arith.constant 0 : i32
    return %c0_i32, %c0_i32_0 : i32, i32
  }
  func.func @transform_1(%arg0: i32) -> (i32, i32) {
    %c0_i32 = arith.constant 0 : i32
    %c0_i32_0 = arith.constant 0 : i32
    %c0_i32_1 = arith.constant 0 : i32
    return %c0_i32, %c0_i32_0 : i32, i32
  }
  func.func @transform_2(%arg0: i32) -> (i32, i32) {
    %c0_i32 = arith.constant 0 : i32
    %c0_i32_0 = arith.constant 0 : i32
    %c0_i32_1 = arith.constant 0 : i32
    return %c0_i32, %c0_i32_0 : i32, i32
  }
  func.func @transform_3(%arg0: i32) -> (i32, i32) {
    %c0_i32 = arith.constant 0 : i32
    %c0_i32_0 = arith.constant 0 : i32
    %c0_i32_1 = arith.constant 0 : i32
    return %c0_i32, %c0_i32_0 : i32, i32
  }
  func.func @transform_4(%arg0: i32) -> (i32, i32) {
    %c0_i32 = arith.constant 0 : i32
    %c0_i32_0 = arith.constant 0 : i32
    %c0_i32_1 = arith.constant 0 : i32
    return %c0_i32, %c0_i32_0 : i32, i32
  }
  func.func @transform_5(%arg0: i32) -> (i32, i32) {
    %c0_i32 = arith.constant 0 : i32
    %c0_i32_0 = arith.constant 0 : i32
    %c0_i32_1 = arith.constant 0 : i32
    return %c0_i32, %c0_i32_0 : i32, i32
  }
}

</mosaic_0001>

<llo_original>
// kernel: policy_head_forward.1
$region0: #{policy_head_forward.1}
  #allocation0 [shape = 'u32[]', space=smem, size = 0x4, offset = 0x4, fixed_abs, tag = 'smem constant byte address 0x4 - core index']
  #allocation1 [shape = 'u32[144,128]{1,0:T(1,128)}', space=vmem, size = 0x12000, scoped, tag = 'internal scratch']
  #allocation2 [shape = 'bf16[2,768]{1,0:T(2,128)(2,1)}', space=vmem, size = 0xc00, scoped, tag = 'scratch operand']
  %s0 = inlined_call_operand.vmem [shape: f32[512,361], index: 0, kind: input, shape index: {}]
  %s1 = inlined_call_operand.vmem [shape: bf16[2,256], index: 1, kind: input, shape index: {}]
  %s2 = inlined_call_operand.vmem [shape: f32[2,2], index: 2, kind: input, shape index: {}]
  %s3 = inlined_call_operand.vmem [shape: bf16[768,362], index: 3, kind: input, shape index: {}]
  %s4 = inlined_call_operand.vmem [shape: f32[1,362], index: 4, kind: input, shape index: {}]
  %s5 = inlined_call_operand.hbm [shape: f32[2,362], index: 5, kind: output, shape index: {}]
  %s6 = sld [smem:[#allocation0]]
  $region30: #{policy_head_forward.1} parent=0
    _
  %s8 = ssub.s32 1, %s6
  %s9 = scalar_select 0, %s8, %s6
  $region1: #{policy_head_forward.1} parent=0
    #allocation3 [shape = 'u8[3072]{0}', space=vmem, size = 0xc00, scoped, tag = 'output window, operand 0, single buffered']
    #allocation4 [shape = 's32[1]{0}', space=sflag, size = 0x4, scoped, tag = 'scoped memory for policy_head_forward.1']
    %10 = vsyncpa [#allocation4], 0
    // Predicated region
    $region2: #{policy_head_forward.1} parent=1 // pred_check
      _
    $region3: #{policy_head_forward.1} parent=1 // pred_check_branch
      %12 = sbr.rel (0) target = $region5
    $region4: #{policy_head_forward.1} parent=1 // pred_region
      _
    $region5: #{policy_head_forward.1} parent=1 // pred_fallthru
      _
    // Predicated region
    $region6: #{policy_head_forward.1} parent=1 // pred_check
      _
    $region7: #{policy_head_forward.1} parent=1 // pred_check_branch
      %14 = sbr.rel (0) target = $region9
    $region8: #{policy_head_forward.1} parent=1 // pred_region
      _
    $region9: #{policy_head_forward.1} parent=1 // pred_fallthru
      _
    // Predicated region
    $region10: #{policy_head_forward.1} parent=1 // pred_check
      _
    $region11: #{policy_head_forward.1} parent=1 // pred_check_branch
      %16 = sbr.rel (0) target = $region13
    $region12: #{policy_head_forward.1} parent=1 // pred_region
      _
    $region13: #{policy_head_forward.1} parent=1 // pred_fallthru
      _
    // Predicated region
    $region14: #{policy_head_forward.1} parent=1 // pred_check
      _
    $region15: #{policy_head_forward.1} parent=1 // pred_check_branch
      %18 = sbr.rel (0) target = $region17
    $region16: #{policy_head_forward.1} parent=1 // pred_region
      _
    $region17: #{policy_head_forward.1} parent=1 // pred_fallthru
      _
    // Predicated region
    $region18: #{policy_head_forward.1} parent=1 // pred_check
      _
    $region19: #{policy_head_forward.1} parent=1 // pred_check_branch
      %20 = sbr.rel (0) target = $region21
    $region20: #{policy_head_forward.1} parent=1 // pred_region
      _
    $region21: #{policy_head_forward.1} parent=1 // pred_fallthru
      _
    %v22 = vld [vmem:[%s1] sm:$0x3]
    %v23 = vld [vmem:[%s0] sm:$0xff]
    %v24 = vld [vmem:[%s0 + $0x8] sm:$0xff]
    %v25 = vld [vmem:[%s0 + $0x10] sm:$0xff]
    %v26 = vld [vmem:[%s0 + $0x18] sm:$0xff]
    %v27 = vld [vmem:[%s0 + $0x20] sm:$0xff]
    %v28 = vld [vmem:[%s0 + $0x28] sm:$0xff]
    %v29 = vld [vmem:[%s0 + $0x30] sm:$0xff]
    %v30 = vld [vmem:[%s0 + $0x38] sm:$0xff]
    %v31 = vld [vmem:[%s0 + $0x40] sm:$0xff]
    %v32 = vld [vmem:[%s0 + $0x48] sm:$0xff]
    %v33 = vld [vmem:[%s0 + $0x50] sm:$0xff]
    %v34 = vld [vmem:[%s0 + $0x58] sm:$0xff]
    %v35 = vld [vmem:[%s0 + $0x60] sm:$0xff]
    %v36 = vld [vmem:[%s0 + $0x68] sm:$0xff]
    %v37 = vld [vmem:[%s0 + $0x70] sm:$0xff]
    %v38 = vld [vmem:[%s0 + $0x78] sm:$0xff]
    %v39 = vld [vmem:[%s0 + $0x80] sm:$0xff]
    %v40 = vld [vmem:[%s0 + $0x88] sm:$0xff]
    %v41 = vld [vmem:[%s0 + $0x90] sm:$0xff]
    %v42 = vld [vmem:[%s0 + $0x98] sm:$0xff]
    %v43 = vld [vmem:[%s0 + $0xa0] sm:$0xff]
    %v44 = vld [vmem:[%s0 + $0xa8] sm:$0xff]
    %v45 = vld [vmem:[%s0 + $0xb0] sm:$0xff]
    %v46 = vld [vmem:[%s0 + $0xb8] sm:$0xff]
    %v47 = vld [vmem:[%s0 + $0xc0] sm:$0xff]
    %v48 = vld [vmem:[%s0 + $0xc8] sm:$0xff]
    %v49 = vld [vmem:[%s0 + $0xd0] sm:$0xff]
    %v50 = vld [vmem:[%s0 + $0xd8] sm:$0xff]
    %v51 = vld [vmem:[%s0 + $0xe0] sm:$0xff]
    %v52 = vld [vmem:[%s0 + $0xe8] sm:$0xff]
    %v53 = vld [vmem:[%s0 + $0xf0] sm:$0xff]
    %v54 = vld [vmem:[%s0 + $0xf8] sm:$0xff]
    %v55 = vld [vmem:[%s0 + $0x100] sm:$0xff]
    %v56 = vld [vmem:[%s0 + $0x108] sm:$0xff]
    %v57 = vld [vmem:[%s0 + $0x110] sm:$0xff]
    %v58 = vld [vmem:[%s0 + $0x118] sm:$0xff]
    %v59 = vld [vmem:[%s0 + $0x120] sm:$0xff]
    %v60 = vld [vmem:[%s0 + $0x128] sm:$0xff]
    %v61 = vld [vmem:[%s0 + $0x130] sm:$0xff]
    %v62 = vld [vmem:[%s0 + $0x138] sm:$0xff]
    %v63 = vld [vmem:[%s0 + $0x140] sm:$0xff]
    %v64 = vld [vmem:[%s0 + $0x148] sm:$0xff]
    %v65 = vld [vmem:[%s0 + $0x150] sm:$0xff]
    %v66 = vld [vmem:[%s0 + $0x158] sm:$0xff]
    %v67 = vld [vmem:[%s0 + $0x160] sm:$0xff]
    %v68 = vld [vmem:[%s0 + $0x168] sm:$0xff]
    %v69 = vld [vmem:[%s0 + $0x170] sm:$0xff]
    %v70 = vld [vmem:[%s0 + $0x178] sm:$0xff]
    %v71 = vld [vmem:[%s0 + $0x180] sm:$0xff]
    %v72 = vld [vmem:[%s0 + $0x188] sm:$0xff]
    %v73 = vld [vmem:[%s0 + $0x190] sm:$0xff]
    %v74 = vld [vmem:[%s0 + $0x198] sm:$0xff]
    %v75 = vld [vmem:[%s0 + $0x1a0] sm:$0xff]
    %v76 = vld [vmem:[%s0 + $0x1a8] sm:$0xff]
    %v77 = vld [vmem:[%s0 + $0x1b0] sm:$0xff]
    %v78 = vld [vmem:[%s0 + $0x1b8] sm:$0xff]
    %v79 = vld [vmem:[%s0 + $0x1c0] sm:$0xff]
    %v80 = vld [vmem:[%s0 + $0x1c8] sm:$0xff]
    %v81 = vld [vmem:[%s0 + $0x1d0] sm:$0xff]
    %v82 = vld [vmem:[%s0 + $0x1d8] sm:$0xff]
    %v83 = vld [vmem:[%s0 + $0x1e0] sm:$0xff]
    %v84 = vld [vmem:[%s0 + $0x1e8] sm:$0xff]
    %v85 = vld [vmem:[%s0 + $0x1f0] sm:$0xff]
    %v86 = vld [vmem:[%s0 + $0x1f8] sm:$0xff]
    %v87 = vld [vmem:[%s0 + $0x200] sm:$0xff]
    %v88 = vld [vmem:[%s0 + $0x208] sm:$0xff]
    %v89 = vld [vmem:[%s0 + $0x210] sm:$0xff]
    %v90 = vld [vmem:[%s0 + $0x218] sm:$0xff]
    %v91 = vld [vmem:[%s0 + $0x220] sm:$0xff]
    %v92 = vld [vmem:[%s0 + $0x228] sm:$0xff]
    %v93 = vld [vmem:[%s0 + $0x230] sm:$0xff]
    %v94 = vld [vmem:[%s0 + $0x238] sm:$0xff]
    %v95 = vld [vmem:[%s0 + $0x240] sm:$0xff]
    %v96 = vld [vmem:[%s0 + $0x248] sm:$0xff]
    %v97 = vld [vmem:[%s0 + $0x250] sm:$0xff]
    %v98 = vld [vmem:[%s0 + $0x258] sm:$0xff]
    %v99 = vld [vmem:[%s0 + $0x260] sm:$0xff]
    %v100 = vld [vmem:[%s0 + $0x268] sm:$0xff]
    %v101 = vld [vmem:[%s0 + $0x270] sm:$0xff]
    %v102 = vld [vmem:[%s0 + $0x278] sm:$0xff]
    %v103 = vld [vmem:[%s0 + $0x280] sm:$0xff]
    %v104 = vld [vmem:[%s0 + $0x288] sm:$0xff]
    %v105 = vld [vmem:[%s0 + $0x290] sm:$0xff]
    %v106 = vld [vmem:[%s0 + $0x298] sm:$0xff]
    %v107 = vld [vmem:[%s0 + $0x2a0] sm:$0xff]
    %v108 = vld [vmem:[%s0 + $0x2a8] sm:$0xff]
    %v109 = vld [vmem:[%s0 + $0x2b0] sm:$0xff]
    %v110 = vld [vmem:[%s0 + $0x2b8] sm:$0xff]
    %v111 = vld [vmem:[%s0 + $0x2c0] sm:$0xff]
    %v112 = vld [vmem:[%s0 + $0x2c8] sm:$0xff]
    %v113 = vld [vmem:[%s0 + $0x2d0] sm:$0xff]
    %v114 = vld [vmem:[%s0 + $0x2d8] sm:$0xff]
    %v115 = vld [vmem:[%s0 + $0x2e0] sm:$0xff]
    %v116 = vld [vmem:[%s0 + $0x2e8] sm:$0xff]
    %v117 = vld [vmem:[%s0 + $0x2f0] sm:$0xff]
    %v118 = vld [vmem:[%s0 + $0x2f8] sm:$0xff]
    %v119 = vpack.c.bf16 %v26, %v23
    %v120 = vpack.c.bf16 %v27, %v24
    %v121 = vpack.c.bf16 %v28, %v25
    %v122 = vpack.c.bf16 %v32, %v29
    %v123 = vpack.c.bf16 %v33, %v30
    %v124 = vpack.c.bf16 %v34, %v31
    %v125 = vpack.c.bf16 %v38, %v35
    %v126 = vpack.c.bf16 %v39, %v36
    %v127 = vpack.c.bf16 %v40, %v37
    %v128 = vpack.c.bf16 %v44, %v41
    %v129 = vpack.c.bf16 %v45, %v42
    %v130 = vpack.c.bf16 %v46, %v43
    %v131 = vpack.c.bf16 %v50, %v47
    %v132 = vpack.c.bf16 %v51, %v48
    %v133 = vpack.c.bf16 %v52, %v49
    %v134 = vpack.c.bf16 %v56, %v53
    %v135 = vpack.c.bf16 %v57, %v54
    %v136 = vpack.c.bf16 %v58, %v55
    %v137 = vpack.c.bf16 %v62, %v59
    %v138 = vpack.c.bf16 %v63, %v60
    %v139 = vpack.c.bf16 %v64, %v61
    %v140 = vpack.c.bf16 %v68, %v65
    %v141 = vpack.c.bf16 %v69, %v66
    %v142 = vpack.c.bf16 %v70, %v67
    %v143 = vpack.c.bf16 %v74, %v71
    %v144 = vpack.c.bf16 %v75, %v72
    %v145 = vpack.c.bf16 %v76, %v73
    %v146 = vpack.c.bf16 %v80, %v77
    %v147 = vpack.c.bf16 %v81, %v78
    %v148 = vpack.c.bf16 %v82, %v79
    %v149 = vpack.c.bf16 %v86, %v83
    %v150 = vpack.c.bf16 %v87, %v84
    %v151 = vpack.c.bf16 %v88, %v85
    %v152 = vpack.c.bf16 %v92, %v89
    %v153 = vpack.c.bf16 %v93, %v90
    %v154 = vpack.c.bf16 %v94, %v91
    %v155 = vpack.c.bf16 %v98, %v95
    %v156 = vpack.c.bf16 %v99, %v96
    %v157 = vpack.c.bf16 %v100, %v97
    %v158 = vpack.c.bf16 %v104, %v101
    %v159 = vpack.c.bf16 %v105, %v102
    %v160 = vpack.c.bf16 %v106, %v103
    %v161 = vpack.c.bf16 %v110, %v107
    %v162 = vpack.c.bf16 %v111, %v108
    %v163 = vpack.c.bf16 %v112, %v109
    %v164 = vpack.c.bf16 %v116, %v113
    %v165 = vpack.c.bf16 %v117, %v114
    %v166 = vpack.c.bf16 %v118, %v115
    %v169 = vunpack.c.l.s4 1966171168
    %v170 = vunpack.c.0.s8 %v169
    %v171 = vlaneseq
    %v172 = vshrl.u32 %v171, 7
    %v173 = vsub.s32 %v170, %v172
    %v174 = vrot.slane %v22, %v173
    %v175 = vcombine.high %v174, %v174
    %v177 = vunpack.c.l.s4 1966171168
    %v178 = vunpack.c.0.s8 %v177
    %v179 = vlaneseq
    %v180 = vshrl.u32 %v179, 7
    %v181 = vsub.s32 %v178, %v180
    %v182 = vrot.slane %v174, %v181
    %v184 = vunpack.c.l.s4 1966171168
    %v185 = vunpack.c.0.s8 %v184
    %v186 = vlaneseq
    %v187 = vshrl.u32 %v186, 7
    %v188 = vsub.s32 %v185, %v187
    %v189 = vrot.slane %v175, %v188
    %192 = vmatprep.subr.bf16.mxu0 %v120
    %193 = vmatpush1.bf16.msra.mxu0 %v119
    %194 = vmatprep.subr.bf16.mxu0 %v123
    %195 = vmatpush1.bf16.msra.mxu0 %v122
    %196 = vmatprep.subr.bf16.mxu0 %v126
    %197 = vmatpush1.bf16.msra.mxu0 %v125
    %198 = vmatprep.subr.bf16.mxu0 %v129
    %199 = vmatpush1.bf16.msra.mxu0 %v128
    %200 = vmatprep.subr.bf16.mxu0 %v132
    %201 = vmatpush1.bf16.msra.mxu0 %v131
    %202 = vmatprep.subr.bf16.mxu0 %v135
    %203 = vmatpush1.bf16.msra.mxu0 %v134
    %204 = vmatprep.subr.bf16.mxu0 %v138
    %205 = vmatpush1.bf16.msra.mxu0 %v137
    %206 = vmatprep.subr.bf16.mxu0 %v141
    %207 = vmatpush1.bf16.msra.mxu0 %v140
    %208 = vmatprep.subr.bf16.mxu0 %v144
    %209 = vmatpush1.bf16.msra.mxu0 %v143
    %210 = vmatprep.subr.bf16.mxu0 %v147
    %211 = vmatpush1.bf16.msra.mxu0 %v146
    %212 = vmatprep.subr.bf16.mxu0 %v150
    %213 = vmatpush1.bf16.msra.mxu0 %v149
    %214 = vmatprep.subr.bf16.mxu0 %v153
    %215 = vmatpush1.bf16.msra.mxu0 %v152
    %216 = vmatprep.subr.bf16.mxu0 %v156
    %217 = vmatpush1.bf16.msra.mxu0 %v155
    %218 = vmatprep.subr.bf16.mxu0 %v159
    %219 = vmatpush1.bf16.msra.mxu0 %v158
    %220 = vmatprep.subr.bf16.mxu0 %v162
    %221 = vmatpush1.bf16.msra.mxu0 %v161
    %222 = vmatprep.subr.bf16.mxu0 %v165
    %223 = vmatpush1.bf16.msra.mxu0 %v164
    %224 = vmatprep.mubr.bf16.mxu0 %v189
    %225 = vmatmul.mubr.bf16.gmra.mrb[0].mxu0 %v182
    %v226 = vpop.f32.mrb[0].mxu0
    %v227 = vadd.f32 0.0, %v226
    %v228 = vpop.f32.mrb[0].mxu0
    %v229 = vadd.f32 0.0, %v228
    %v230 = vpop.f32.mrb[0].mxu0
    %v231 = vpop.f32.mrb[0].mxu0
    %232 = vdwg.mxu0
    %233 = vmatprep.subr.bf16.mxu0 0
    %234 = vmatpush1.bf16.msra.mxu0 %v121
    %235 = vmatprep.subr.bf16.mxu0 0
    %236 = vmatpush1.bf16.msra.mxu0 %v124
    %237 = vmatprep.subr.bf16.mxu0 0
    %238 = vmatpush1.bf16.msra.mxu0 %v127
    %239 = vmatprep.subr.bf16.mxu0 0
    %240 = vmatpush1.bf16.msra.mxu0 %v130
    %241 = vmatprep.subr.bf16.mxu0 0
    %242 = vmatpush1.bf16.msra.mxu0 %v133
    %243 = vmatprep.subr.bf16.mxu0 0
    %244 = vmatpush1.bf16.msra.mxu0 %v136
    %245 = vmatprep.subr.bf16.mxu0 0
    %246 = vmatpush1.bf16.msra.mxu0 %v139
    %247 = vmatprep.subr.bf16.mxu0 0
    %248 = vmatpush1.bf16.msra.mxu0 %v142
    %249 = vmatprep.subr.bf16.mxu0 0
    %250 = vmatpush1.bf16.msra.mxu0 %v145
    %251 = vmatprep.subr.bf16.mxu0 0
    %252 = vmatpush1.bf16.msra.mxu0 %v148
    %253 = vmatprep.subr.bf16.mxu0 0
    %254 = vmatpush1.bf16.msra.mxu0 %v151
    %255 = vmatprep.subr.bf16.mxu0 0
    %256 = vmatpush1.bf16.msra.mxu0 %v154
    %257 = vmatprep.subr.bf16.mxu0 0
    %258 = vmatpush1.bf16.msra.mxu0 %v157
    %259 = vmatprep.subr.bf16.mxu0 0
    %260 = vmatpush1.bf16.msra.mxu0 %v160
    %261 = vmatprep.subr.bf16.mxu0 0
    %262 = vmatpush1.bf16.msra.mxu0 %v163
    %263 = vmatprep.subr.bf16.mxu0 0
    %264 = vmatpush1.bf16.msra.mxu0 %v166
    %265 = vmatprep.mubr.bf16.mxu0 %v189
    %266 = vmatmul.mubr.bf16.gmra.mrb[0].mxu0 %v182
    %v267 = vpop.f32.mrb[0].mxu0
    %v268 = vadd.f32 0.0, %v267
    %v269 = vpop.f32.mrb[0].mxu0
    %v270 = vpop.f32.mrb[0].mxu0
    %v271 = vpop.f32.mrb[0].mxu0
    %272 = vdwg.mxu0
    %v273 = vld [vmem:[%s0 + $0x300] sm:$0xff]
    %v274 = vld [vmem:[%s0 + $0x308] sm:$0xff]
    %v275 = vld [vmem:[%s0 + $0x310] sm:$0xff]
    %v276 = vld [vmem:[%s0 + $0x318] sm:$0xff]
    %v277 = vld [vmem:[%s0 + $0x320] sm:$0xff]
    %v278 = vld [vmem:[%s0 + $0x328] sm:$0xff]
    %v279 = vld [vmem:[%s0 + $0x330] sm:$0xff]
    %v280 = vld [vmem:[%s0 + $0x338] sm:$0xff]
    %v281 = vld [vmem:[%s0 + $0x340] sm:$0xff]
    %v282 = vld [vmem:[%s0 + $0x348] sm:$0xff]
    %v283 = vld [vmem:[%s0 + $0x350] sm:$0xff]
    %v284 = vld [vmem:[%s0 + $0x358] sm:$0xff]
    %v285 = vld [vmem:[%s0 + $0x360] sm:$0xff]
    %v286 = vld [vmem:[%s0 + $0x368] sm:$0xff]
    %v287 = vld [vmem:[%s0 + $0x370] sm:$0xff]
    %v288 = vld [vmem:[%s0 + $0x378] sm:$0xff]
    %v289 = vld [vmem:[%s0 + $0x380] sm:$0xff]
    %v290 = vld [vmem:[%s0 + $0x388] sm:$0xff]
    %v291 = vld [vmem:[%s0 + $0x390] sm:$0xff]
    %v292 = vld [vmem:[%s0 + $0x398] sm:$0xff]
    %v293 = vld [vmem:[%s0 + $0x3a0] sm:$0xff]
    %v294 = vld [vmem:[%s0 + $0x3a8] sm:$0xff]
    %v295 = vld [vmem:[%s0 + $0x3b0] sm:$0xff]
    %v296 = vld [vmem:[%s0 + $0x3b8] sm:$0xff]
    %v297 = vld [vmem:[%s0 + $0x3c0] sm:$0xff]
    %v298 = vld [vmem:[%s0 + $0x3c8] sm:$0xff]
    %v299 = vld [vmem:[%s0 + $0x3d0] sm:$0xff]
    %v300 = vld [vmem:[%s0 + $0x3d8] sm:$0xff]
    %v301 = vld [vmem:[%s0 + $0x3e0] sm:$0xff]
    %v302 = vld [vmem:[%s0 + $0x3e8] sm:$0xff]
    %v303 = vld [vmem:[%s0 + $0x3f0] sm:$0xff]
    %v304 = vld [vmem:[%s0 + $0x3f8] sm:$0xff]
    %v305 = vld [vmem:[%s0 + $0x400] sm:$0xff]
    %v306 = vld [vmem:[%s0 + $0x408] sm:$0xff]
    %v307 = vld [vmem:[%s0 + $0x410] sm:$0xff]
    %v308 = vld [vmem:[%s0 + $0x418] sm:$0xff]
    %v309 = vld [vmem:[%s0 + $0x420] sm:$0xff]
    %v310 = vld [vmem:[%s0 + $0x428] sm:$0xff]
    %v311 = vld [vmem:[%s0 + $0x430] sm:$0xff]
    %v312 = vld [vmem:[%s0 + $0x438] sm:$0xff]
    %v313 = vld [vmem:[%s0 + $0x440] sm:$0xff]
    %v314 = vld [vmem:[%s0 + $0x448] sm:$0xff]
    %v315 = vld [vmem:[%s0 + $0x450] sm:$0xff]
    %v316 = vld [vmem:[%s0 + $0x458] sm:$0xff]
    %v317 = vld [vmem:[%s0 + $0x460] sm:$0xff]
    %v318 = vld [vmem:[%s0 + $0x468] sm:$0xff]
    %v319 = vld [vmem:[%s0 + $0x470] sm:$0xff]
    %v320 = vld [vmem:[%s0 + $0x478] sm:$0xff]
    %v321 = vld [vmem:[%s0 + $0x480] sm:$0xff]
    %v322 = vld [vmem:[%s0 + $0x488] sm:$0xff]
    %v323 = vld [vmem:[%s0 + $0x490] sm:$0xff]
    %v324 = vld [vmem:[%s0 + $0x498] sm:$0xff]
    %v325 = vld [vmem:[%s0 + $0x4a0] sm:$0xff]
    %v326 = vld [vmem:[%s0 + $0x4a8] sm:$0xff]
    %v327 = vld [vmem:[%s0 + $0x4b0] sm:$0xff]
    %v328 = vld [vmem:[%s0 + $0x4b8] sm:$0xff]
    %v329 = vld [vmem:[%s0 + $0x4c0] sm:$0xff]
    %v330 = vld [vmem:[%s0 + $0x4c8] sm:$0xff]
    %v331 = vld [vmem:[%s0 + $0x4d0] sm:$0xff]
    %v332 = vld [vmem:[%s0 + $0x4d8] sm:$0xff]
    %v333 = vld [vmem:[%s0 + $0x4e0] sm:$0xff]
    %v334 = vld [vmem:[%s0 + $0x4e8] sm:$0xff]
    %v335 = vld [vmem:[%s0 + $0x4f0] sm:$0xff]
    %v336 = vld [vmem:[%s0 + $0x4f8] sm:$0xff]
    %v337 = vld [vmem:[%s0 + $0x500] sm:$0xff]
    %v338 = vld [vmem:[%s0 + $0x508] sm:$0xff]
    %v339 = vld [vmem:[%s0 + $0x510] sm:$0xff]
    %v340 = vld [vmem:[%s0 + $0x518] sm:$0xff]
    %v341 = vld [vmem:[%s0 + $0x520] sm:$0xff]
    %v342 = vld [vmem:[%s0 + $0x528] sm:$0xff]
    %v343 = vld [vmem:[%s0 + $0x530] sm:$0xff]
    %v344 = vld [vmem:[%s0 + $0x538] sm:$0xff]
    %v345 = vld [vmem:[%s0 + $0x540] sm:$0xff]
    %v346 = vld [vmem:[%s0 + $0x548] sm:$0xff]
    %v347 = vld [vmem:[%s0 + $0x550] sm:$0xff]
    %v348 = vld [vmem:[%s0 + $0x558] sm:$0xff]
    %v349 = vld [vmem:[%s0 + $0x560] sm:$0xff]
    %v350 = vld [vmem:[%s0 + $0x568] sm:$0xff]
    %v351 = vld [vmem:[%s0 + $0x570] sm:$0xff]
    %v352 = vld [vmem:[%s0 + $0x578] sm:$0xff]
    %v353 = vld [vmem:[%s0 + $0x580] sm:$0xff]
    %v354 = vld [vmem:[%s0 + $0x588] sm:$0xff]
    %v355 = vld [vmem:[%s0 + $0x590] sm:$0xff]
    %v356 = vld [vmem:[%s0 + $0x598] sm:$0xff]
    %v357 = vld [vmem:[%s0 + $0x5a0] sm:$0xff]
    %v358 = vld [vmem:[%s0 + $0x5a8] sm:$0xff]
    %v359 = vld [vmem:[%s0 + $0x5b0] sm:$0xff]
    %v360 = vld [vmem:[%s0 + $0x5b8] sm:$0xff]
    %v361 = vld [vmem:[%s0 + $0x5c0] sm:$0xff]
    %v362 = vld [vmem:[%s0 + $0x5c8] sm:$0xff]
    %v363 = vld [vmem:[%s0 + $0x5d0] sm:$0xff]
    %v364 = vld [vmem:[%s0 + $0x5d8] sm:$0xff]
    %v365 = vld [vmem:[%s0 + $0x5e0] sm:$0xff]
    %v366 = vld [vmem:[%s0 + $0x5e8] sm:$0xff]
    %v367 = vld [vmem:[%s0 + $0x5f0] sm:$0xff]
    %v368 = vld [vmem:[%s0 + $0x5f8] sm:$0xff]
    %v369 = vpack.c.bf16 %v276, %v273
    %v370 = vpack.c.bf16 %v277, %v274
    %v371 = vpack.c.bf16 %v278, %v275
    %v372 = vpack.c.bf16 %v282, %v279
    %v373 = vpack.c.bf16 %v283, %v280
    %v374 = vpack.c.bf16 %v284, %v281
    %v375 = vpack.c.bf16 %v288, %v285
    %v376 = vpack.c.bf16 %v289, %v286
    %v377 = vpack.c.bf16 %v290, %v287
    %v378 = vpack.c.bf16 %v294, %v291
    %v379 = vpack.c.bf16 %v295, %v292
    %v380 = vpack.c.bf16 %v296, %v293
    %v381 = vpack.c.bf16 %v300, %v297
    %v382 = vpack.c.bf16 %v301, %v298
    %v383 = vpack.c.bf16 %v302, %v299
    %v384 = vpack.c.bf16 %v306, %v303
    %v385 = vpack.c.bf16 %v307, %v304
    %v386 = vpack.c.bf16 %v308, %v305
    %v387 = vpack.c.bf16 %v312, %v309
    %v388 = vpack.c.bf16 %v313, %v310
    %v389 = vpack.c.bf16 %v314, %v311
    %v390 = vpack.c.bf16 %v318, %v315
    %v391 = vpack.c.bf16 %v319, %v316
    %v392 = vpack.c.bf16 %v320, %v317
    %v393 = vpack.c.bf16 %v324, %v321
    %v394 = vpack.c.bf16 %v325, %v322
    %v395 = vpack.c.bf16 %v326, %v323
    %v396 = vpack.c.bf16 %v330, %v327
    %v397 = vpack.c.bf16 %v331, %v328
    %v398 = vpack.c.bf16 %v332, %v329
    %v399 = vpack.c.bf16 %v336, %v333
    %v400 = vpack.c.bf16 %v337, %v334
    %v401 = vpack.c.bf16 %v338, %v335
    %v402 = vpack.c.bf16 %v342, %v339
    %v403 = vpack.c.bf16 %v343, %v340
    %v404 = vpack.c.bf16 %v344, %v341
    %v405 = vpack.c.bf16 %v348, %v345
    %v406 = vpack.c.bf16 %v349, %v346
    %v407 = vpack.c.bf16 %v350, %v347
    %v408 = vpack.c.bf16 %v354, %v351
    %v409 = vpack.c.bf16 %v355, %v352
    %v410 = vpack.c.bf16 %v356, %v353
    %v411 = vpack.c.bf16 %v360, %v357
    %v412 = vpack.c.bf16 %v361, %v358
    %v413 = vpack.c.bf16 %v362, %v359
    %v414 = vpack.c.bf16 %v366, %v363
    %v415 = vpack.c.bf16 %v367, %v364
    %v416 = vpack.c.bf16 %v368, %v365
    %417 = vmatprep.subr.bf16.mxu0 %v370
    %418 = vmatpush1.bf16.msra.mxu0 %v369
    %419 = vmatprep.subr.bf16.mxu0 %v373
    %420 = vmatpush1.bf16.msra.mxu0 %v372
    %421 = vmatprep.subr.bf16.mxu0 %v376
    %422 = vmatpush1.bf16.msra.mxu0 %v375
    %423 = vmatprep.subr.bf16.mxu0 %v379
    %424 = vmatpush1.bf16.msra.mxu0 %v378
    %425 = vmatprep.subr.bf16.mxu0 %v382
    %426 = vmatpush1.bf16.msra.mxu0 %v381
    %427 = vmatprep.subr.bf16.mxu0 %v385
    %428 = vmatpush1.bf16.msra.mxu0 %v384
    %429 = vmatprep.subr.bf16.mxu0 %v388
    %430 = vmatpush1.bf16.msra.mxu0 %v387
    %431 = vmatprep.subr.bf16.mxu0 %v391
    %432 = vmatpush1.bf16.msra.mxu0 %v390
    %433 = vmatprep.subr.bf16.mxu0 %v394
    %434 = vmatpush1.bf16.msra.mxu0 %v393
    %435 = vmatprep.subr.bf16.mxu0 %v397
    %436 = vmatpush1.bf16.msra.mxu0 %v396
    %437 = vmatprep.subr.bf16.mxu0 %v400
    %438 = vmatpush1.bf16.msra.mxu0 %v399
    %439 = vmatprep.subr.bf16.mxu0 %v403
    %440 = vmatpush1.bf16.msra.mxu0 %v402
    %441 = vmatprep.subr.bf16.mxu0 %v406
    %442 = vmatpush1.bf16.msra.mxu0 %v405
    %443 = vmatprep.subr.bf16.mxu0 %v409
    %444 = vmatpush1.bf16.msra.mxu0 %v408
    %445 = vmatprep.subr.bf16.mxu0 %v412
    %446 = vmatpush1.bf16.msra.mxu0 %v411
    %447 = vmatprep.subr.bf16.mxu0 %v415
    %448 = vmatpush1.bf16.msra.mxu0 %v414
    %449 = vmatprep.mubr.bf16.mxu0 %v189
    %450 = vmatmul.mubr.bf16.gmra.mrb[0].mxu0 %v182
    %v451 = vpop.f32.mrb[0].mxu0
    %v452 = vadd.f32 0.0, %v451
    %v453 = vpop.f32.mrb[0].mxu0
    %v454 = vadd.f32 0.0, %v453
    %v455 = vpop.f32.mrb[0].mxu0
    %v456 = vpop.f32.mrb[0].mxu0
    %457 = vdwg.mxu0
    %458 = vmatprep.subr.bf16.mxu0 0
    %459 = vmatpush1.bf16.msra.mxu0 %v371
    %460 = vmatprep.subr.bf16.mxu0 0
    %461 = vmatpush1.bf16.msra.mxu0 %v374
    %462 = vmatprep.subr.bf16.mxu0 0
    %463 = vmatpush1.bf16.msra.mxu0 %v377
    %464 = vmatprep.subr.bf16.mxu0 0
    %465 = vmatpush1.bf16.msra.mxu0 %v380
    %466 = vmatprep.subr.bf16.mxu0 0
    %467 = vmatpush1.bf16.msra.mxu0 %v383
    %468 = vmatprep.subr.bf16.mxu0 0
    %469 = vmatpush1.bf16.msra.mxu0 %v386
    %470 = vmatprep.subr.bf16.mxu0 0
    %471 = vmatpush1.bf16.msra.mxu0 %v389
    %472 = vmatprep.subr.bf16.mxu0 0
    %473 = vmatpush1.bf16.msra.mxu0 %v392
    %474 = vmatprep.subr.bf16.mxu0 0
    %475 = vmatpush1.bf16.msra.mxu0 %v395
    %476 = vmatprep.subr.bf16.mxu0 0
    %477 = vmatpush1.bf16.msra.mxu0 %v398
    %478 = vmatprep.subr.bf16.mxu0 0
    %479 = vmatpush1.bf16.msra.mxu0 %v401
    %480 = vmatprep.subr.bf16.mxu0 0
    %481 = vmatpush1.bf16.msra.mxu0 %v404
    %482 = vmatprep.subr.bf16.mxu0 0
    %483 = vmatpush1.bf16.msra.mxu0 %v407
    %484 = vmatprep.subr.bf16.mxu0 0
    %485 = vmatpush1.bf16.msra.mxu0 %v410
    %486 = vmatprep.subr.bf16.mxu0 0
    %487 = vmatpush1.bf16.msra.mxu0 %v413
    %488 = vmatprep.subr.bf16.mxu0 0
    %489 = vmatpush1.bf16.msra.mxu0 %v416
    %490 = vmatprep.mubr.bf16.mxu0 %v189
    %491 = vmatmul.mubr.bf16.gmra.mrb[0].mxu0 %v182
    %v492 = vpop.f32.mrb[0].mxu0
    %v493 = vadd.f32 0.0, %v492
    %v494 = vpop.f32.mrb[0].mxu0
    %v495 = vpop.f32.mrb[0].mxu0
    %v496 = vpop.f32.mrb[0].mxu0
    %497 = vdwg.mxu0
    %v498 = vmul.f32 %v227, %v227
    %v499 = vmul.f32 %v229, %v229
    %v500 = vmul.f32 %v268, %v268
    %v501 = vadd.f32 %v227, %v452
    %v502 = vadd.f32 %v229, %v454
    %v503 = vadd.f32 %v268, %v493
    %v504 = vmul.f32 %v452, %v452
    %v505 = vmul.f32 %v454, %v454
    %v506 = vmul.f32 %v493, %v493
    %v507 = vadd.f32 %v498, %v504
    %v508 = vadd.f32 %v499, %v505
    %v509 = vadd.f32 %v500, %v506
    %vm510 = vcmask 1041408
    %v511 = vsel %vm510, %v501, 0.0
    %v512 = vsel %vm510, %v502, 0.0
    %v513 = vadd.f32 %v511, %v512
    %vm514 = vcmask 852992
    %v515 = vsel %vm514, %v503, 0.0
    %v516 = vadd.f32 %v513, %v515
    %517 = vadd.xlane.f32.xlu0 %v516
    %v518 = vpop.xlane.xlu0 %517
    %v519 = vmul.f32 %v518, 0.0013850415
    %v520 = vsel %vm510, %v507, 0.0
    %v521 = vsel %vm510, %v508, 0.0
    %v522 = vadd.f32 %v520, %v521
    %v523 = vsel %vm514, %v509, 0.0
    %v524 = vadd.f32 %v522, %v523
    %525 = vadd.xlane.f32.xlu0 %v524
    %v526 = vpop.xlane.xlu0 %525
    %v527 = vmul.f32 %v526, 0.0013850415
    %v528 = vmul.f32 %v519, %v519
    %v529 = vsub.f32 %v527, %v528
    %v530 = vmax.f32 %v529, 0.0
    %v531 = vld [vmem:[%s2] sm:$0x3]
    %v532 = vadd.f32 %v530, 1e-05
    %v533 = vrsqrt.pop %v532
    %v534 = vmul.f32 %v531, %v533
    %v535 = vmul.f32 %v519, %v534
    %537 = vrot.lane.b32.xlu0 %v535, 1
    %v538 = vpop.permute.xlu0 %537
    %v540 = vsub.f32 %v531, %v538
    %541 = vst [vmem:[#allocation2] sm:$0x3f] 0
    %543 = vset.pattern.permute.xlu0 0
    %544 = vperm.xlu0 %543, %v534
    %v545 = vpop.permute.xlu0 %544
    %v547 = vmul.f32 %v227, %v545
    %v548 = vmul.f32 %v229, %v545
    %v549 = vmul.f32 %v268, %v545
    %551 = vset.pattern.permute.xlu0 1
    %552 = vperm.xlu0 %551, %v540
    %v553 = vpop.permute.xlu0 %552
    %v555 = vadd.f32 %v547, %v553
    %v556 = vadd.f32 %v548, %v553
    %v557 = vadd.f32 %v549, %v553
    %v558 = vmax.f32 %v555, 0.0
    %v559 = vmax.f32 %v556, 0.0
    %v560 = vmax.f32 %v557, 0.0
    %v561 = vpack.c.bf16 %v558, %v558
    %v562 = vpack.c.bf16 %v559, %v559
    %v563 = vpack.c.bf16 %v560, %v560
    %v567 = vcombine.low %v561, %v562
    %v569 = vunpack.c.l.s4 1966171168
    %v570 = vunpack.c.0.s8 %v569
    %v571 = vlaneseq
    %v572 = vshrl.u32 %v571, 7
    %v573 = vsub.s32 %v570, %v572
    %v574 = vrot.slane %v567, %v573
    %v576 = vunpack.c.l.s4 1966171168
    %v577 = vunpack.c.0.s8 %v576
    %v578 = vlaneseq
    %v579 = vshrl.u32 %v578, 7
    %v580 = vsub.s32 %v577, %v579
    %v581 = vrot.slane %v563, %v580
    %v582 = vcombine.low %v574, %v581
    %v584 = vunpack.c.l.s4 1966171168
    %v585 = vunpack.c.0.s8 %v584
    %v586 = vlaneseq
    %v587 = vshrl.u32 %v586, 7
    %v588 = vsub.s32 %v585, %v587
    %v589 = vrot.slane %v582, %v588
    %vm591 = vcmask 1040384
    %vm592 = vsmask.f32 256
    %vm593 = vmand %vm591, %vm592
    %vm594 = vcmask 1041409
    %vm595 = vsmask.f32 1280
    %vm596 = vmand %vm594, %vm595
    %vm597 = vmor %vm596, %vm593
    %vm598 = vcmask 854018
    %vm599 = vsmask.f32 2304
    %vm600 = vmand %vm598, %vm599
    %vm601 = vmor %vm600, %vm597
    %v602 = vld [vmem:[#allocation2] sm:$0x7]
    %v603 = vsel %vm601, %v589, %v602
    %604 = vst [vmem:[#allocation2] sm:$0x7] %v603
    %v606 = vshrl.u32 %v589, 16
    %v608 = vrot.slane %v606, 7
    %v609 = vrot.slane %v608, 1
    %v611 = vld [vmem:[#allocation2 + $0x3] sm:$0x7]
    %v612 = vsel %vm601, %v609, %v611
    %613 = vst [vmem:[#allocation2 + $0x3] sm:$0x7] %v612
    %v614 = vmul.f32 %v452, %v545
    %v615 = vmul.f32 %v454, %v545
    %v616 = vmul.f32 %v493, %v545
    %v617 = vadd.f32 %v614, %v553
    %v618 = vadd.f32 %v615, %v553
    %v619 = vadd.f32 %v616, %v553
    %v620 = vmax.f32 %v617, 0.0
    %v621 = vmax.f32 %v618, 0.0
    %v622 = vmax.f32 %v619, 0.0
    %v623 = vpack.c.bf16 %v620, %v620
    %v624 = vpack.c.bf16 %v621, %v621
    %v625 = vpack.c.bf16 %v622, %v622
    %v629 = vcombine.low %v623, %v624
    %v631 = vunpack.c.l.s4 1966171168
    %v632 = vunpack.c.0.s8 %v631
    %v633 = vlaneseq
    %v634 = vshrl.u32 %v633, 7
    %v635 = vsub.s32 %v632, %v634
    %v636 = vrot.slane %v629, %v635
    %v638 = vunpack.c.l.s4 1966171168
    %v639 = vunpack.c.0.s8 %v638
    %v640 = vlaneseq
    %v641 = vshrl.u32 %v640, 7
    %v642 = vsub.s32 %v639, %v641
    %v643 = vrot.slane %v625, %v642
    %v644 = vcombine.low %v636, %v643
    %v646 = vunpack.c.l.s4 1966171168
    %v647 = vunpack.c.0.s8 %v646
    %v648 = vlaneseq
    %v649 = vshrl.u32 %v648, 7
    %v650 = vsub.s32 %v647, %v649
    %v651 = vrot.slane %v644, %v650
    %v653 = vshll.u32 %v651, 16
    %vm656 = vsmask.f32 7938
    %vm657 = vmand %vm591, %vm656
    %vm658 = vsmask.f32 7942
    %vm659 = vmand %vm594, %vm658
    %vm660 = vmor %vm659, %vm657
    %vm661 = vsmask.f32 7946
    %vm662 = vmand %vm598, %vm661
    %vm663 = vmor %vm662, %vm660
    %v664 = vld [vmem:[#allocation2] sm:$0x7]
    %v665 = vsel %vm663, %v653, %v664
    %666 = vst [vmem:[#allocation2] sm:$0x7] %v665
    %v668 = vld [vmem:[#allocation2 + $0x3] sm:$0x7]
    %v669 = vsel %vm663, %v651, %v668
    %670 = vst [vmem:[#allocation2 + $0x3] sm:$0x7] %v669
    %v671 = vld [vmem:[#allocation2] sm:$0x3f]
    %v672 = vld [vmem:[%s3] sm:$0xff]
    %v673 = vld [vmem:[%s3 + $0x8] sm:$0xf]
    %v674 = vld [vmem:[%s3 + $0xc] sm:$0xff]
    %v675 = vld [vmem:[%s3 + $0x14] sm:$0xf]
    %v676 = vld [vmem:[%s3 + $0x18] sm:$0xff]
    %v677 = vld [vmem:[%s3 + $0x20] sm:$0xf]
    %v678 = vld [vmem:[%s3 + $0x24] sm:$0xff]
    %v679 = vld [vmem:[%s3 + $0x2c] sm:$0xf]
    %v680 = vld [vmem:[%s3 + $0x30] sm:$0xff]
    %v681 = vld [vmem:[%s3 + $0x38] sm:$0xf]
    %v682 = vld [vmem:[%s3 + $0x3c] sm:$0xff]
    %v683 = vld [vmem:[%s3 + $0x44] sm:$0xf]
    %v684 = vld [vmem:[%s3 + $0x48] sm:$0xff]
    %v685 = vld [vmem:[%s3 + $0x50] sm:$0xf]
    %v686 = vld [vmem:[%s3 + $0x54] sm:$0xff]
    %v687 = vld [vmem:[%s3 + $0x5c] sm:$0xf]
    %v688 = vld [vmem:[%s3 + $0x60] sm:$0xff]
    %v689 = vld [vmem:[%s3 + $0x68] sm:$0xf]
    %v690 = vld [vmem:[%s3 + $0x6c] sm:$0xff]
    %v691 = vld [vmem:[%s3 + $0x74] sm:$0xf]
    %v692 = vld [vmem:[%s3 + $0x78] sm:$0xff]
    %v693 = vld [vmem:[%s3 + $0x80] sm:$0xf]
    %v694 = vld [vmem:[%s3 + $0x84] sm:$0xff]
    %v695 = vld [vmem:[%s3 + $0x8c] sm:$0xf]
    %v696 = vld [vmem:[%s3 + $0x90] sm:$0xff]
    %v697 = vld [vmem:[%s3 + $0x98] sm:$0xf]
    %v698 = vld [vmem:[%s3 + $0x9c] sm:$0xff]
    %v699 = vld [vmem:[%s3 + $0xa4] sm:$0xf]
    %v700 = vld [vmem:[%s3 + $0xa8] sm:$0xff]
    %v701 = vld [vmem:[%s3 + $0xb0] sm:$0xf]
    %v702 = vld [vmem:[%s3 + $0xb4] sm:$0xff]
    %v703 = vld [vmem:[%s3 + $0xbc] sm:$0xf]
    %v704 = vld [vmem:[%s3 + $0xc0] sm:$0xff]
    %v705 = vld [vmem:[%s3 + $0xc8] sm:$0xf]
    %v706 = vld [vmem:[%s3 + $0xcc] sm:$0xff]
    %v707 = vld [vmem:[%s3 + $0xd4] sm:$0xf]
    %v708 = vld [vmem:[%s3 + $0xd8] sm:$0xff]
    %v709 = vld [vmem:[%s3 + $0xe0] sm:$0xf]
    %v710 = vld [vmem:[%s3 + $0xe4] sm:$0xff]
    %v711 = vld [vmem:[%s3 + $0xec] sm:$0xf]
    %v712 = vld [vmem:[%s3 + $0xf0] sm:$0xff]
    %v713 = vld [vmem:[%s3 + $0xf8] sm:$0xf]
    %v714 = vld [vmem:[%s3 + $0xfc] sm:$0xff]
    %v715 = vld [vmem:[%s3 + $0x104] sm:$0xf]
    %v716 = vld [vmem:[%s3 + $0x108] sm:$0xff]
    %v717 = vld [vmem:[%s3 + $0x110] sm:$0xf]
    %v718 = vld [vmem:[%s3 + $0x114] sm:$0xff]
    %v719 = vld [vmem:[%s3 + $0x11c] sm:$0xf]
    %v720 = vld [vmem:[%s3 + $0x120] sm:$0xff]
    %v721 = vld [vmem:[%s3 + $0x128] sm:$0xf]
    %v722 = vld [vmem:[%s3 + $0x12c] sm:$0xff]
    %v723 = vld [vmem:[%s3 + $0x134] sm:$0xf]
    %v724 = vld [vmem:[%s3 + $0x138] sm:$0xff]
    %v725 = vld [vmem:[%s3 + $0x140] sm:$0xf]
    %v726 = vld [vmem:[%s3 + $0x144] sm:$0xff]
    %v727 = vld [vmem:[%s3 + $0x14c] sm:$0xf]
    %v728 = vld [vmem:[%s3 + $0x150] sm:$0xff]
    %v729 = vld [vmem:[%s3 + $0x158] sm:$0xf]
    %v730 = vld [vmem:[%s3 + $0x15c] sm:$0xff]
    %v731 = vld [vmem:[%s3 + $0x164] sm:$0xf]
    %v732 = vld [vmem:[%s3 + $0x168] sm:$0xff]
    %v733 = vld [vmem:[%s3 + $0x170] sm:$0xf]
    %v734 = vld [vmem:[%s3 + $0x174] sm:$0xff]
    %v735 = vld [vmem:[%s3 + $0x17c] sm:$0xf]
    %v736 = vld [vmem:[%s3 + $0x180] sm:$0xff]
    %v737 = vld [vmem:[%s3 + $0x188] sm:$0xf]
    %v738 = vld [vmem:[%s3 + $0x18c] sm:$0xff]
    %v739 = vld [vmem:[%s3 + $0x194] sm:$0xf]
    %v740 = vld [vmem:[%s3 + $0x198] sm:$0xff]
    %v741 = vld [vmem:[%s3 + $0x1a0] sm:$0xf]
    %v742 = vld [vmem:[%s3 + $0x1a4] sm:$0xff]
    %v743 = vld [vmem:[%s3 + $0x1ac] sm:$0xf]
    %v744 = vld [vmem:[%s3 + $0x1b0] sm:$0xff]
    %v745 = vld [vmem:[%s3 + $0x1b8] sm:$0xf]
    %v746 = vld [vmem:[%s3 + $0x1bc] sm:$0xff]
    %v747 = vld [vmem:[%s3 + $0x1c4] sm:$0xf]
    %v748 = vld [vmem:[%s3 + $0x1c8] sm:$0xff]
    %v749 = vld [vmem:[%s3 + $0x1d0] sm:$0xf]
    %v750 = vld [vmem:[%s3 + $0x1d4] sm:$0xff]
    %v751 = vld [vmem:[%s3 + $0x1dc] sm:$0xf]
    %v752 = vld [vmem:[%s3 + $0x1e0] sm:$0xff]
    %v753 = vld [vmem:[%s3 + $0x1e8] sm:$0xf]
    %v754 = vld [vmem:[%s3 + $0x1ec] sm:$0xff]
    %v755 = vld [vmem:[%s3 + $0x1f4] sm:$0xf]
    %v756 = vld [vmem:[%s3 + $0x1f8] sm:$0xff]
    %v757 = vld [vmem:[%s3 + $0x200] sm:$0xf]
    %v758 = vld [vmem:[%s3 + $0x204] sm:$0xff]
    %v759 = vld [vmem:[%s3 + $0x20c] sm:$0xf]
    %v760 = vld [vmem:[%s3 + $0x210] sm:$0xff]
    %v761 = vld [vmem:[%s3 + $0x218] sm:$0xf]
    %v762 = vld [vmem:[%s3 + $0x21c] sm:$0xff]
    %v763 = vld [vmem:[%s3 + $0x224] sm:$0xf]
    %v764 = vld [vmem:[%s3 + $0x228] sm:$0xff]
    %v765 = vld [vmem:[%s3 + $0x230] sm:$0xf]
    %v766 = vld [vmem:[%s3 + $0x234] sm:$0xff]
    %v767 = vld [vmem:[%s3 + $0x23c] sm:$0xf]
    %v768 = vld [vmem:[%s3 + $0x240] sm:$0xff]
    %v769 = vld [vmem:[%s3 + $0x248] sm:$0xf]
    %v770 = vld [vmem:[%s3 + $0x24c] sm:$0xff]
    %v771 = vld [vmem:[%s3 + $0x254] sm:$0xf]
    %v772 = vld [vmem:[%s3 + $0x258] sm:$0xff]
    %v773 = vld [vmem:[%s3 + $0x260] sm:$0xf]
    %v774 = vld [vmem:[%s3 + $0x264] sm:$0xff]
    %v775 = vld [vmem:[%s3 + $0x26c] sm:$0xf]
    %v776 = vld [vmem:[%s3 + $0x270] sm:$0xff]
    %v777 = vld [vmem:[%s3 + $0x278] sm:$0xf]
    %v778 = vld [vmem:[%s3 + $0x27c] sm:$0xff]
    %v779 = vld [vmem:[%s3 + $0x284] sm:$0xf]
    %v780 = vld [vmem:[%s3 + $0x288] sm:$0xff]
    %v781 = vld [vmem:[%s3 + $0x290] sm:$0xf]
    %v782 = vld [vmem:[%s3 + $0x294] sm:$0xff]
    %v783 = vld [vmem:[%s3 + $0x29c] sm:$0xf]
    %v784 = vld [vmem:[%s3 + $0x2a0] sm:$0xff]
    %v785 = vld [vmem:[%s3 + $0x2a8] sm:$0xf]
    %v786 = vld [vmem:[%s3 + $0x2ac] sm:$0xff]
    %v787 = vld [vmem:[%s3 + $0x2b4] sm:$0xf]
    %v788 = vld [vmem:[%s3 + $0x2b8] sm:$0xff]
    %v789 = vld [vmem:[%s3 + $0x2c0] sm:$0xf]
    %v790 = vld [vmem:[%s3 + $0x2c4] sm:$0xff]
    %v791 = vld [vmem:[%s3 + $0x2cc] sm:$0xf]
    %v792 = vld [vmem:[%s3 + $0x2d0] sm:$0xff]
    %v793 = vld [vmem:[%s3 + $0x2d8] sm:$0xf]
    %v794 = vld [vmem:[%s3 + $0x2dc] sm:$0xff]
    %v795 = vld [vmem:[%s3 + $0x2e4] sm:$0xf]
    %v796 = vld [vmem:[%s3 + $0x2e8] sm:$0xff]
    %v797 = vld [vmem:[%s3 + $0x2f0] sm:$0xf]
    %v798 = vld [vmem:[%s3 + $0x2f4] sm:$0xff]
    %v799 = vld [vmem:[%s3 + $0x2fc] sm:$0xf]
    %v800 = vld [vmem:[%s3 + $0x300] sm:$0xff]
    %v801 = vld [vmem:[%s3 + $0x308] sm:$0xf]
    %v802 = vld [vmem:[%s3 + $0x30c] sm:$0xff]
    %v803 = vld [vmem:[%s3 + $0x314] sm:$0xf]
    %v804 = vld [vmem:[%s3 + $0x318] sm:$0xff]
    %v805 = vld [vmem:[%s3 + $0x320] sm:$0xf]
    %v806 = vld [vmem:[%s3 + $0x324] sm:$0xff]
    %v807 = vld [vmem:[%s3 + $0x32c] sm:$0xf]
    %v808 = vld [vmem:[%s3 + $0x330] sm:$0xff]
    %v809 = vld [vmem:[%s3 + $0x338] sm:$0xf]
    %v810 = vld [vmem:[%s3 + $0x33c] sm:$0xff]
    %v811 = vld [vmem:[%s3 + $0x344] sm:$0xf]
    %v812 = vld [vmem:[%s3 + $0x348] sm:$0xff]
    %v813 = vld [vmem:[%s3 + $0x350] sm:$0xf]
    %v814 = vld [vmem:[%s3 + $0x354] sm:$0xff]
    %v815 = vld [vmem:[%s3 + $0x35c] sm:$0xf]
    %v816 = vld [vmem:[%s3 + $0x360] sm:$0xff]
    %v817 = vld [vmem:[%s3 + $0x368] sm:$0xf]
    %v818 = vld [vmem:[%s3 + $0x36c] sm:$0xff]
    %v819 = vld [vmem:[%s3 + $0x374] sm:$0xf]
    %v820 = vld [vmem:[%s3 + $0x378] sm:$0xff]
    %v821 = vld [vmem:[%s3 + $0x380] sm:$0xf]
    %v822 = vld [vmem:[%s3 + $0x384] sm:$0xff]
    %v823 = vld [vmem:[%s3 + $0x38c] sm:$0xf]
    %v824 = vld [vmem:[%s3 + $0x390] sm:$0xff]
    %v825 = vld [vmem:[%s3 + $0x398] sm:$0xf]
    %v826 = vld [vmem:[%s3 + $0x39c] sm:$0xff]
    %v827 = vld [vmem:[%s3 + $0x3a4] sm:$0xf]
    %v828 = vld [vmem:[%s3 + $0x3a8] sm:$0xff]
    %v829 = vld [vmem:[%s3 + $0x3b0] sm:$0xf]
    %v830 = vld [vmem:[%s3 + $0x3b4] sm:$0xff]
    %v831 = vld [vmem:[%s3 + $0x3bc] sm:$0xf]
    %v832 = vld [vmem:[%s3 + $0x3c0] sm:$0xff]
    %v833 = vld [vmem:[%s3 + $0x3c8] sm:$0xf]
    %v834 = vld [vmem:[%s3 + $0x3cc] sm:$0xff]
    %v835 = vld [vmem:[%s3 + $0x3d4] sm:$0xf]
    %v836 = vld [vmem:[%s3 + $0x3d8] sm:$0xff]
    %v837 = vld [vmem:[%s3 + $0x3e0] sm:$0xf]
    %v838 = vld [vmem:[%s3 + $0x3e4] sm:$0xff]
    %v839 = vld [vmem:[%s3 + $0x3ec] sm:$0xf]
    %v840 = vld [vmem:[%s3 + $0x3f0] sm:$0xff]
    %v841 = vld [vmem:[%s3 + $0x3f8] sm:$0xf]
    %v842 = vld [vmem:[%s3 + $0x3fc] sm:$0xff]
    %v843 = vld [vmem:[%s3 + $0x404] sm:$0xf]
    %v844 = vld [vmem:[%s3 + $0x408] sm:$0xff]
    %v845 = vld [vmem:[%s3 + $0x410] sm:$0xf]
    %v846 = vld [vmem:[%s3 + $0x414] sm:$0xff]
    %v847 = vld [vmem:[%s3 + $0x41c] sm:$0xf]
    %v848 = vld [vmem:[%s3 + $0x420] sm:$0xff]
    %v849 = vld [vmem:[%s3 + $0x428] sm:$0xf]
    %v850 = vld [vmem:[%s3 + $0x42c] sm:$0xff]
    %v851 = vld [vmem:[%s3 + $0x434] sm:$0xf]
    %v852 = vld [vmem:[%s3 + $0x438] sm:$0xff]
    %v853 = vld [vmem:[%s3 + $0x440] sm:$0xf]
    %v854 = vld [vmem:[%s3 + $0x444] sm:$0xff]
    %v855 = vld [vmem:[%s3 + $0x44c] sm:$0xf]
    %v856 = vld [vmem:[%s3 + $0x450] sm:$0xff]
    %v857 = vld [vmem:[%s3 + $0x458] sm:$0xf]
    %v858 = vld [vmem:[%s3 + $0x45c] sm:$0xff]
    %v859 = vld [vmem:[%s3 + $0x464] sm:$0xf]
    %v860 = vld [vmem:[%s3 + $0x468] sm:$0xff]
    %v861 = vld [vmem:[%s3 + $0x470] sm:$0xf]
    %v862 = vld [vmem:[%s3 + $0x474] sm:$0xff]
    %v863 = vld [vmem:[%s3 + $0x47c] sm:$0xf]
    %v864 = vld [vmem:[%s4] sm:$0x7]
    %v866 = vlaneseq
    %v867 = vshrl.u32 %v866, 7
    %v868 = vsub.s32 0, %v867
    %v869 = vrot.slane %v864, %v868
    %v870 = vlaneseq
    %v871 = vshrl.u32 %v870, 7
    %v872 = vsub.s32 1, %v871
    %v873 = vrot.slane %v864, %v872
    %v874 = vlaneseq
    %v875 = vshrl.u32 %v874, 7
    %v876 = vsub.s32 2, %v875
    %v877 = vrot.slane %v864, %v876
    %v882 = vcombine.high %v671, %v671
    %v884 = vunpack.c.l.s4 1966171168
    %v885 = vunpack.c.0.s8 %v884
    %v886 = vlaneseq
    %v887 = vshrl.u32 %v886, 7
    %v888 = vsub.s32 %v885, %v887
    %v889 = vrot.slane %v671, %v888
    %v891 = vunpack.c.l.s4 1966171168
    %v892 = vunpack.c.0.s8 %v891
    %v893 = vlaneseq
    %v894 = vshrl.u32 %v893, 7
    %v895 = vsub.s32 %v892, %v894
    %v896 = vrot.slane %v882, %v895
    %v897 = vcombine.high %v889, %v889
    %v898 = vcombine.high %v896, %v896
    %v900 = vunpack.c.l.s4 1966171168
    %v901 = vunpack.c.0.s8 %v900
    %v902 = vlaneseq
    %v903 = vshrl.u32 %v902, 7
    %v904 = vsub.s32 %v901, %v903
    %v905 = vrot.slane %v889, %v904
    %v907 = vunpack.c.l.s4 1966171168
    %v908 = vunpack.c.0.s8 %v907
    %v909 = vlaneseq
    %v910 = vshrl.u32 %v909, 7
    %v911 = vsub.s32 %v908, %v910
    %v912 = vrot.slane %v896, %v911
    %v914 = vunpack.c.l.s4 1966171168
    %v915 = vunpack.c.0.s8 %v914
    %v916 = vlaneseq
    %v917 = vshrl.u32 %v916, 7
    %v918 = vsub.s32 %v915, %v917
    %v919 = vrot.slane %v897, %v918
    %v921 = vunpack.c.l.s4 1966171168
    %v922 = vunpack.c.0.s8 %v921
    %v923 = vlaneseq
    %v924 = vshrl.u32 %v923, 7
    %v925 = vsub.s32 %v922, %v924
    %v926 = vrot.slane %v898, %v925
    %v927 = vcombine.high %v905, %v905
    %v928 = vcombine.high %v919, %v919
    %v1127 = vunpack.c.l.b16 %v672
    %v1128 = vunpack.c.h.b16 %v672
    %v1129 = vunpack.c.l.b16 %v673
    %v1130 = vunpack.c.l.b16 %v674
    %v1131 = vunpack.c.h.b16 %v674
    %v1132 = vunpack.c.l.b16 %v675
    %v1133 = vunpack.c.l.b16 %v676
    %v1134 = vunpack.c.h.b16 %v676
    %v1135 = vunpack.c.l.b16 %v677
    %v1136 = vunpack.c.l.b16 %v678
    %v1137 = vunpack.c.h.b16 %v678
    %v1138 = vunpack.c.l.b16 %v679
    %v1139 = vunpack.c.l.b16 %v680
    %v1140 = vunpack.c.h.b16 %v680
    %v1141 = vunpack.c.l.b16 %v681
    %v1142 = vunpack.c.l.b16 %v682
    %v1143 = vunpack.c.h.b16 %v682
    %v1144 = vunpack.c.l.b16 %v683
    %v1145 = vunpack.c.l.b16 %v684
    %v1146 = vunpack.c.h.b16 %v684
    %v1147 = vunpack.c.l.b16 %v685
    %v1148 = vunpack.c.l.b16 %v686
    %v1149 = vunpack.c.h.b16 %v686
    %v1150 = vunpack.c.l.b16 %v687
    %v1151 = vunpack.c.l.b16 %v688
    %v1152 = vunpack.c.h.b16 %v688
    %v1153 = vunpack.c.l.b16 %v689
    %v1154 = vunpack.c.l.b16 %v690
    %v1155 = vunpack.c.h.b16 %v690
    %v1156 = vunpack.c.l.b16 %v691
    %v1157 = vunpack.c.l.b16 %v692
    %v1158 = vunpack.c.h.b16 %v692
    %v1159 = vunpack.c.l.b16 %v693
    %v1160 = vunpack.c.l.b16 %v694
    %v1161 = vunpack.c.h.b16 %v694
    %v1162 = vunpack.c.l.b16 %v695
    %v1163 = vunpack.c.l.b16 %v696
    %v1164 = vunpack.c.h.b16 %v696
    %v1165 = vunpack.c.l.b16 %v697
    %v1166 = vunpack.c.l.b16 %v698
    %v1167 = vunpack.c.h.b16 %v698
    %v1168 = vunpack.c.l.b16 %v699
    %v1169 = vunpack.c.l.b16 %v700
    %v1170 = vunpack.c.h.b16 %v700
    %v1171 = vunpack.c.l.b16 %v701
    %v1172 = vunpack.c.l.b16 %v702
    %v1173 = vunpack.c.h.b16 %v702
    %v1174 = vunpack.c.l.b16 %v703
    %v1175 = vunpack.c.l.b16 %v704
    %v1176 = vunpack.c.h.b16 %v704
    %v1177 = vunpack.c.l.b16 %v705
    %v1178 = vunpack.c.l.b16 %v706
    %v1179 = vunpack.c.h.b16 %v706
    %v1180 = vunpack.c.l.b16 %v707
    %v1181 = vunpack.c.l.b16 %v708
    %v1182 = vunpack.c.h.b16 %v708
    %v1183 = vunpack.c.l.b16 %v709
    %v1184 = vunpack.c.l.b16 %v710
    %v1185 = vunpack.c.h.b16 %v710
    %v1186 = vunpack.c.l.b16 %v711
    %v1187 = vunpack.c.l.b16 %v712
    %v1188 = vunpack.c.h.b16 %v712
    %v1189 = vunpack.c.l.b16 %v713
    %v1190 = vunpack.c.l.b16 %v714
    %v1191 = vunpack.c.h.b16 %v714
    %v1192 = vunpack.c.l.b16 %v715
    %v1193 = vunpack.c.l.b16 %v716
    %v1194 = vunpack.c.h.b16 %v716
    %v1195 = vunpack.c.l.b16 %v717
    %v1196 = vunpack.c.l.b16 %v718
    %v1197 = vunpack.c.h.b16 %v718
    %v1198 = vunpack.c.l.b16 %v719
    %v1199 = vunpack.c.l.b16 %v720
    %v1200 = vunpack.c.h.b16 %v720
    %v1201 = vunpack.c.l.b16 %v721
    %v1202 = vunpack.c.l.b16 %v722
    %v1203 = vunpack.c.h.b16 %v722
    %v1204 = vunpack.c.l.b16 %v723
    %v1205 = vunpack.c.l.b16 %v724
    %v1206 = vunpack.c.h.b16 %v724
    %v1207 = vunpack.c.l.b16 %v725
    %v1208 = vunpack.c.l.b16 %v726
    %v1209 = vunpack.c.h.b16 %v726
    %v1210 = vunpack.c.l.b16 %v727
    %v1211 = vunpack.c.l.b16 %v728
    %v1212 = vunpack.c.h.b16 %v728
    %v1213 = vunpack.c.l.b16 %v729
    %v1214 = vunpack.c.l.b16 %v730
    %v1215 = vunpack.c.h.b16 %v730
    %v1216 = vunpack.c.l.b16 %v731
    %v1217 = vunpack.c.l.b16 %v732
    %v1218 = vunpack.c.h.b16 %v732
    %v1219 = vunpack.c.l.b16 %v733
    %v1220 = vunpack.c.l.b16 %v734
    %v1221 = vunpack.c.h.b16 %v734
    %v1222 = vunpack.c.l.b16 %v735
    %v1223 = vunpack.c.l.b16 %v736
    %v1224 = vunpack.c.h.b16 %v736
    %v1225 = vunpack.c.l.b16 %v737
    %v1226 = vunpack.c.l.b16 %v738
    %v1227 = vunpack.c.h.b16 %v738
    %v1228 = vunpack.c.l.b16 %v739
    %v1229 = vunpack.c.l.b16 %v740
    %v1230 = vunpack.c.h.b16 %v740
    %v1231 = vunpack.c.l.b16 %v741
    %v1232 = vunpack.c.l.b16 %v742
    %v1233 = vunpack.c.h.b16 %v742
    %v1234 = vunpack.c.l.b16 %v743
    %v1235 = vunpack.c.l.b16 %v744
    %v1236 = vunpack.c.h.b16 %v744
    %v1237 = vunpack.c.l.b16 %v745
    %v1238 = vunpack.c.l.b16 %v746
    %v1239 = vunpack.c.h.b16 %v746
    %v1240 = vunpack.c.l.b16 %v747
    %v1241 = vunpack.c.l.b16 %v748
    %v1242 = vunpack.c.h.b16 %v748
    %v1243 = vunpack.c.l.b16 %v749
    %v1244 = vunpack.c.l.b16 %v750
    %v1245 = vunpack.c.h.b16 %v750
    %v1246 = vunpack.c.l.b16 %v751
    %v1247 = vunpack.c.l.b16 %v752
    %v1248 = vunpack.c.h.b16 %v752
    %v1249 = vunpack.c.l.b16 %v753
    %v1250 = vunpack.c.l.b16 %v754
    %v1251 = vunpack.c.h.b16 %v754
    %v1252 = vunpack.c.l.b16 %v755
    %v1253 = vunpack.c.l.b16 %v756
    %v1254 = vunpack.c.h.b16 %v756
    %v1255 = vunpack.c.l.b16 %v757
    %v1256 = vunpack.c.l.b16 %v758
    %v1257 = vunpack.c.h.b16 %v758
    %v1258 = vunpack.c.l.b16 %v759
    %v1259 = vunpack.c.l.b16 %v760
    %v1260 = vunpack.c.h.b16 %v760
    %v1261 = vunpack.c.l.b16 %v761
    %v1262 = vunpack.c.l.b16 %v762
    %v1263 = vunpack.c.h.b16 %v762
    %v1264 = vunpack.c.l.b16 %v763
    %v1265 = vunpack.c.l.b16 %v764
    %v1266 = vunpack.c.h.b16 %v764
    %v1267 = vunpack.c.l.b16 %v765
    %v1268 = vunpack.c.l.b16 %v766
    %v1269 = vunpack.c.h.b16 %v766
    %v1270 = vunpack.c.l.b16 %v767
    %v1271 = vunpack.c.l.b16 %v768
    %v1272 = vunpack.c.h.b16 %v768
    %v1273 = vunpack.c.l.b16 %v769
    %v1274 = vunpack.c.l.b16 %v770
    %v1275 = vunpack.c.h.b16 %v770
    %v1276 = vunpack.c.l.b16 %v771
    %v1277 = vunpack.c.l.b16 %v772
    %v1278 = vunpack.c.h.b16 %v772
    %v1279 = vunpack.c.l.b16 %v773
    %v1280 = vunpack.c.l.b16 %v774
    %v1281 = vunpack.c.h.b16 %v774
    %v1282 = vunpack.c.l.b16 %v775
    %v1283 = vunpack.c.l.b16 %v776
    %v1284 = vunpack.c.h.b16 %v776
    %v1285 = vunpack.c.l.b16 %v777
    %v1286 = vunpack.c.l.b16 %v778
    %v1287 = vunpack.c.h.b16 %v778
    %v1288 = vunpack.c.l.b16 %v779
    %v1289 = vunpack.c.l.b16 %v780
    %v1290 = vunpack.c.h.b16 %v780
    %v1291 = vunpack.c.l.b16 %v781
    %v1292 = vunpack.c.l.b16 %v782
    %v1293 = vunpack.c.h.b16 %v782
    %v1294 = vunpack.c.l.b16 %v783
    %v1295 = vunpack.c.l.b16 %v784
    %v1296 = vunpack.c.h.b16 %v784
    %v1297 = vunpack.c.l.b16 %v785
    %v1298 = vunpack.c.l.b16 %v786
    %v1299 = vunpack.c.h.b16 %v786
    %v1300 = vunpack.c.l.b16 %v787
    %v1301 = vunpack.c.l.b16 %v788
    %v1302 = vunpack.c.h.b16 %v788
    %v1303 = vunpack.c.l.b16 %v789
    %v1304 = vunpack.c.l.b16 %v790
    %v1305 = vunpack.c.h.b16 %v790
    %v1306 = vunpack.c.l.b16 %v791
    %v1307 = vunpack.c.l.b16 %v792
    %v1308 = vunpack.c.h.b16 %v792
    %v1309 = vunpack.c.l.b16 %v793
    %v1310 = vunpack.c.l.b16 %v794
    %v1311 = vunpack.c.h.b16 %v794
    %v1312 = vunpack.c.l.b16 %v795
    %v1313 = vunpack.c.l.b16 %v796
    %v1314 = vunpack.c.h.b16 %v796
    %v1315 = vunpack.c.l.b16 %v797
    %v1316 = vunpack.c.l.b16 %v798
    %v1317 = vunpack.c.h.b16 %v798
    %v1318 = vunpack.c.l.b16 %v799
    %v1319 = vunpack.c.l.b16 %v800
    %v1320 = vunpack.c.h.b16 %v800
    %v1321 = vunpack.c.l.b16 %v801
    %v1322 = vunpack.c.l.b16 %v802
    %v1323 = vunpack.c.h.b16 %v802
    %v1324 = vunpack.c.l.b16 %v803
    %v1325 = vunpack.c.l.b16 %v804
    %v1326 = vunpack.c.h.b16 %v804
    %v1327 = vunpack.c.l.b16 %v805
    %v1328 = vunpack.c.l.b16 %v806
    %v1329 = vunpack.c.h.b16 %v806
    %v1330 = vunpack.c.l.b16 %v807
    %v1331 = vunpack.c.l.b16 %v808
    %v1332 = vunpack.c.h.b16 %v808
    %v1333 = vunpack.c.l.b16 %v809
    %v1334 = vunpack.c.l.b16 %v810
    %v1335 = vunpack.c.h.b16 %v810
    %v1336 = vunpack.c.l.b16 %v811
    %v1337 = vunpack.c.l.b16 %v812
    %v1338 = vunpack.c.h.b16 %v812
    %v1339 = vunpack.c.l.b16 %v813
    %v1340 = vunpack.c.l.b16 %v814
    %v1341 = vunpack.c.h.b16 %v814
    %v1342 = vunpack.c.l.b16 %v815
    %v1343 = vunpack.c.l.b16 %v816
    %v1344 = vunpack.c.h.b16 %v816
    %v1345 = vunpack.c.l.b16 %v817
    %v1346 = vunpack.c.l.b16 %v818
    %v1347 = vunpack.c.h.b16 %v818
    %v1348 = vunpack.c.l.b16 %v819
    %v1349 = vunpack.c.l.b16 %v820
    %v1350 = vunpack.c.h.b16 %v820
    %v1351 = vunpack.c.l.b16 %v821
    %v1352 = vunpack.c.l.b16 %v822
    %v1353 = vunpack.c.h.b16 %v822
    %v1354 = vunpack.c.l.b16 %v823
    %v1355 = vunpack.c.l.b16 %v824
    %v1356 = vunpack.c.h.b16 %v824
    %v1357 = vunpack.c.l.b16 %v825
    %v1358 = vunpack.c.l.b16 %v826
    %v1359 = vunpack.c.h.b16 %v826
    %v1360 = vunpack.c.l.b16 %v827
    %v1361 = vunpack.c.l.b16 %v828
    %v1362 = vunpack.c.h.b16 %v828
    %v1363 = vunpack.c.l.b16 %v829
    %v1364 = vunpack.c.l.b16 %v830
    %v1365 = vunpack.c.h.b16 %v830
    %v1366 = vunpack.c.l.b16 %v831
    %v1367 = vunpack.c.l.b16 %v832
    %v1368 = vunpack.c.h.b16 %v832
    %v1369 = vunpack.c.l.b16 %v833
    %v1370 = vunpack.c.l.b16 %v834
    %v1371 = vunpack.c.h.b16 %v834
    %v1372 = vunpack.c.l.b16 %v835
    %v1373 = vunpack.c.l.b16 %v836
    %v1374 = vunpack.c.h.b16 %v836
    %v1375 = vunpack.c.l.b16 %v837
    %v1376 = vunpack.c.l.b16 %v838
    %v1377 = vunpack.c.h.b16 %v838
    %v1378 = vunpack.c.l.b16 %v839
    %v1379 = vunpack.c.l.b16 %v840
    %v1380 = vunpack.c.h.b16 %v840
    %v1381 = vunpack.c.l.b16 %v841
    %v1382 = vunpack.c.l.b16 %v842
    %v1383 = vunpack.c.h.b16 %v842
    %v1384 = vunpack.c.l.b16 %v843
    %v1385 = vunpack.c.l.b16 %v844
    %v1386 = vunpack.c.h.b16 %v844
    %v1387 = vunpack.c.l.b16 %v845
    %v1388 = vunpack.c.l.b16 %v846
    %v1389 = vunpack.c.h.b16 %v846
    %v1390 = vunpack.c.l.b16 %v847
    %v1391 = vunpack.c.l.b16 %v848
    %v1392 = vunpack.c.h.b16 %v848
    %v1393 = vunpack.c.l.b16 %v849
    %v1394 = vunpack.c.l.b16 %v850
    %v1395 = vunpack.c.h.b16 %v850
    %v1396 = vunpack.c.l.b16 %v851
    %v1397 = vunpack.c.l.b16 %v852
    %v1398 = vunpack.c.h.b16 %v852
    %v1399 = vunpack.c.l.b16 %v853
    %v1400 = vunpack.c.l.b16 %v854
    %v1401 = vunpack.c.h.b16 %v854
    %v1402 = vunpack.c.l.b16 %v855
    %v1403 = vunpack.c.l.b16 %v856
    %v1404 = vunpack.c.h.b16 %v856
    %v1405 = vunpack.c.l.b16 %v857
    %v1406 = vunpack.c.l.b16 %v858
    %v1407 = vunpack.c.h.b16 %v858
    %v1408 = vunpack.c.l.b16 %v859
    %v1409 = vunpack.c.l.b16 %v860
    %v1410 = vunpack.c.h.b16 %v860
    %v1411 = vunpack.c.l.b16 %v861
    %v1412 = vunpack.c.l.b16 %v862
    %v1413 = vunpack.c.h.b16 %v862
    %v1414 = vunpack.c.l.b16 %v863
    %v1415 = vpack.c.b16 %v1130, %v1127
    %v1416 = vpack.c.b16 %v1131, %v1128
    %v1417 = vpack.c.b16 %v1132, %v1129
    %v1418 = vpack.c.b16 %v1136, %v1133
    %v1419 = vpack.c.b16 %v1137, %v1134
    %v1420 = vpack.c.b16 %v1138, %v1135
    %v1421 = vpack.c.b16 %v1142, %v1139
    %v1422 = vpack.c.b16 %v1143, %v1140
    %v1423 = vpack.c.b16 %v1144, %v1141
    %v1424 = vpack.c.b16 %v1148, %v1145
    %v1425 = vpack.c.b16 %v1149, %v1146
    %v1426 = vpack.c.b16 %v1150, %v1147
    %v1427 = vpack.c.b16 %v1154, %v1151
    %v1428 = vpack.c.b16 %v1155, %v1152
    %v1429 = vpack.c.b16 %v1156, %v1153
    %v1430 = vpack.c.b16 %v1160, %v1157
    %v1431 = vpack.c.b16 %v1161, %v1158
    %v1432 = vpack.c.b16 %v1162, %v1159
    %v1433 = vpack.c.b16 %v1166, %v1163
    %v1434 = vpack.c.b16 %v1167, %v1164
    %v1435 = vpack.c.b16 %v1168, %v1165
    %v1436 = vpack.c.b16 %v1172, %v1169
    %v1437 = vpack.c.b16 %v1173, %v1170
    %v1438 = vpack.c.b16 %v1174, %v1171
    %v1439 = vpack.c.b16 %v1178, %v1175
    %v1440 = vpack.c.b16 %v1179, %v1176
    %v1441 = vpack.c.b16 %v1180, %v1177
    %v1442 = vpack.c.b16 %v1184, %v1181
    %v1443 = vpack.c.b16 %v1185, %v1182
    %v1444 = vpack.c.b16 %v1186, %v1183
    %v1445 = vpack.c.b16 %v1190, %v1187
    %v1446 = vpack.c.b16 %v1191, %v1188
    %v1447 = vpack.c.b16 %v1192, %v1189
    %v1448 = vpack.c.b16 %v1196, %v1193
    %v1449 = vpack.c.b16 %v1197, %v1194
    %v1450 = vpack.c.b16 %v1198, %v1195
    %v1451 = vpack.c.b16 %v1202, %v1199
    %v1452 = vpack.c.b16 %v1203, %v1200
    %v1453 = vpack.c.b16 %v1204, %v1201
    %v1454 = vpack.c.b16 %v1208, %v1205
    %v1455 = vpack.c.b16 %v1209, %v1206
    %v1456 = vpack.c.b16 %v1210, %v1207
    %v1457 = vpack.c.b16 %v1214, %v1211
    %v1458 = vpack.c.b16 %v1215, %v1212
    %v1459 = vpack.c.b16 %v1216, %v1213
    %v1460 = vpack.c.b16 %v1220, %v1217
    %v1461 = vpack.c.b16 %v1221, %v1218
    %v1462 = vpack.c.b16 %v1222, %v1219
    %v1463 = vpack.c.b16 %v1226, %v1223
    %v1464 = vpack.c.b16 %v1227, %v1224
    %v1465 = vpack.c.b16 %v1228, %v1225
    %v1466 = vpack.c.b16 %v1232, %v1229
    %v1467 = vpack.c.b16 %v1233, %v1230
    %v1468 = vpack.c.b16 %v1234, %v1231
    %v1469 = vpack.c.b16 %v1238, %v1235
    %v1470 = vpack.c.b16 %v1239, %v1236
    %v1471 = vpack.c.b16 %v1240, %v1237
    %v1472 = vpack.c.b16 %v1244, %v1241
    %v1473 = vpack.c.b16 %v1245, %v1242
    %v1474 = vpack.c.b16 %v1246, %v1243
    %v1475 = vpack.c.b16 %v1250, %v1247
    %v1476 = vpack.c.b16 %v1251, %v1248
    %v1477 = vpack.c.b16 %v1252, %v1249
    %v1478 = vpack.c.b16 %v1256, %v1253
    %v1479 = vpack.c.b16 %v1257, %v1254
    %v1480 = vpack.c.b16 %v1258, %v1255
    %v1481 = vpack.c.b16 %v1262, %v1259
    %v1482 = vpack.c.b16 %v1263, %v1260
    %v1483 = vpack.c.b16 %v1264, %v1261
    %v1484 = vpack.c.b16 %v1268, %v1265
    %v1485 = vpack.c.b16 %v1269, %v1266
    %v1486 = vpack.c.b16 %v1270, %v1267
    %v1487 = vpack.c.b16 %v1274, %v1271
    %v1488 = vpack.c.b16 %v1275, %v1272
    %v1489 = vpack.c.b16 %v1276, %v1273
    %v1490 = vpack.c.b16 %v1280, %v1277
    %v1491 = vpack.c.b16 %v1281, %v1278
    %v1492 = vpack.c.b16 %v1282, %v1279
    %v1493 = vpack.c.b16 %v1286, %v1283
    %v1494 = vpack.c.b16 %v1287, %v1284
    %v1495 = vpack.c.b16 %v1288, %v1285
    %v1496 = vpack.c.b16 %v1292, %v1289
    %v1497 = vpack.c.b16 %v1293, %v1290
    %v1498 = vpack.c.b16 %v1294, %v1291
    %v1499 = vpack.c.b16 %v1298, %v1295
    %v1500 = vpack.c.b16 %v1299, %v1296
    %v1501 = vpack.c.b16 %v1300, %v1297
    %v1502 = vpack.c.b16 %v1304, %v1301
    %v1503 = vpack.c.b16 %v1305, %v1302
    %v1504 = vpack.c.b16 %v1306, %v1303
    %v1505 = vpack.c.b16 %v1310, %v1307
    %v1506 = vpack.c.b16 %v1311, %v1308
    %v1507 = vpack.c.b16 %v1312, %v1309
    %v1508 = vpack.c.b16 %v1316, %v1313
    %v1509 = vpack.c.b16 %v1317, %v1314
    %v1510 = vpack.c.b16 %v1318, %v1315
    %v1511 = vpack.c.b16 %v1322, %v1319
    %v1512 = vpack.c.b16 %v1323, %v1320
    %v1513 = vpack.c.b16 %v1324, %v1321
    %v1514 = vpack.c.b16 %v1328, %v1325
    %v1515 = vpack.c.b16 %v1329, %v1326
    %v1516 = vpack.c.b16 %v1330, %v1327
    %v1517 = vpack.c.b16 %v1334, %v1331
    %v1518 = vpack.c.b16 %v1335, %v1332
    %v1519 = vpack.c.b16 %v1336, %v1333
    %v1520 = vpack.c.b16 %v1340, %v1337
    %v1521 = vpack.c.b16 %v1341, %v1338
    %v1522 = vpack.c.b16 %v1342, %v1339
    %v1523 = vpack.c.b16 %v1346, %v1343
    %v1524 = vpack.c.b16 %v1347, %v1344
    %v1525 = vpack.c.b16 %v1348, %v1345
    %v1526 = vpack.c.b16 %v1352, %v1349
    %v1527 = vpack.c.b16 %v1353, %v1350
    %v1528 = vpack.c.b16 %v1354, %v1351
    %v1529 = vpack.c.b16 %v1358, %v1355
    %v1530 = vpack.c.b16 %v1359, %v1356
    %v1531 = vpack.c.b16 %v1360, %v1357
    %v1532 = vpack.c.b16 %v1364, %v1361
    %v1533 = vpack.c.b16 %v1365, %v1362
    %v1534 = vpack.c.b16 %v1366, %v1363
    %v1535 = vpack.c.b16 %v1370, %v1367
    %v1536 = vpack.c.b16 %v1371, %v1368
    %v1537 = vpack.c.b16 %v1372, %v1369
    %v1538 = vpack.c.b16 %v1376, %v1373
    %v1539 = vpack.c.b16 %v1377, %v1374
    %v1540 = vpack.c.b16 %v1378, %v1375
    %v1541 = vpack.c.b16 %v1382, %v1379
    %v1542 = vpack.c.b16 %v1383, %v1380
    %v1543 = vpack.c.b16 %v1384, %v1381
    %v1544 = vpack.c.b16 %v1388, %v1385
    %v1545 = vpack.c.b16 %v1389, %v1386
    %v1546 = vpack.c.b16 %v1390, %v1387
    %v1547 = vpack.c.b16 %v1394, %v1391
    %v1548 = vpack.c.b16 %v1395, %v1392
    %v1549 = vpack.c.b16 %v1396, %v1393
    %v1550 = vpack.c.b16 %v1400, %v1397
    %v1551 = vpack.c.b16 %v1401, %v1398
    %v1552 = vpack.c.b16 %v1402, %v1399
    %v1553 = vpack.c.b16 %v1406, %v1403
    %v1554 = vpack.c.b16 %v1407, %v1404
    %v1555 = vpack.c.b16 %v1408, %v1405
    %v1556 = vpack.c.b16 %v1412, %v1409
    %v1557 = vpack.c.b16 %v1413, %v1410
    %v1558 = vpack.c.b16 %v1414, %v1411
    %1703 = vmatprep.subr.bf16.mxu0 %v1416
    %1704 = vmatpush1.bf16.msra.mxu0 %v1415
    %1705 = vmatprep.subr.bf16.mxu0 %v1419
    %1706 = vmatpush1.bf16.msra.mxu0 %v1418
    %1707 = vmatprep.subr.bf16.mxu0 %v1422
    %1708 = vmatpush1.bf16.msra.mxu0 %v1421
    %1709 = vmatprep.subr.bf16.mxu0 %v1425
    %1710 = vmatpush1.bf16.msra.mxu0 %v1424
    %1711 = vmatprep.subr.bf16.mxu0 %v1428
    %1712 = vmatpush1.bf16.msra.mxu0 %v1427
    %1713 = vmatprep.subr.bf16.mxu0 %v1431
    %1714 = vmatpush1.bf16.msra.mxu0 %v1430
    %1715 = vmatprep.subr.bf16.mxu0 %v1434
    %1716 = vmatpush1.bf16.msra.mxu0 %v1433
    %1717 = vmatprep.subr.bf16.mxu0 %v1437
    %1718 = vmatpush1.bf16.msra.mxu0 %v1436
    %1719 = vmatprep.subr.bf16.mxu0 %v1440
    %1720 = vmatpush1.bf16.msra.mxu0 %v1439
    %1721 = vmatprep.subr.bf16.mxu0 %v1443
    %1722 = vmatpush1.bf16.msra.mxu0 %v1442
    %1723 = vmatprep.subr.bf16.mxu0 %v1446
    %1724 = vmatpush1.bf16.msra.mxu0 %v1445
    %1725 = vmatprep.subr.bf16.mxu0 %v1449
    %1726 = vmatpush1.bf16.msra.mxu0 %v1448
    %1727 = vmatprep.subr.bf16.mxu0 %v1452
    %1728 = vmatpush1.bf16.msra.mxu0 %v1451
    %1729 = vmatprep.subr.bf16.mxu0 %v1455
    %1730 = vmatpush1.bf16.msra.mxu0 %v1454
    %1731 = vmatprep.subr.bf16.mxu0 %v1458
    %1732 = vmatpush1.bf16.msra.mxu0 %v1457
    %1733 = vmatprep.subr.bf16.mxu0 %v1461
    %1734 = vmatpush1.bf16.msra.mxu0 %v1460
    %1735 = vmatprep.mubr.bf16.mxu0 %v919
    %1736 = vmatmul.mubr.bf16.gmra.mrb[0].mxu0 %v905
    %v1737 = vpop.f32.mrb[0].mxu0
    %v1738 = vadd.f32 %v869, %v1737
    %v1739 = vpop.f32.mrb[0].mxu0
    %v1740 = vadd.f32 %v873, %v1739
    %v1741 = vpop.f32.mrb[0].mxu0
    %v1742 = vpop.f32.mrb[0].mxu0
    %1743 = vdwg.mxu0
    %1744 = vmatprep.subr.bf16.mxu0 %v1464
    %1745 = vmatpush1.bf16.msra.mxu0 %v1463
    %1746 = vmatprep.subr.bf16.mxu0 %v1467
    %1747 = vmatpush1.bf16.msra.mxu0 %v1466
    %1748 = vmatprep.subr.bf16.mxu0 %v1470
    %1749 = vmatpush1.bf16.msra.mxu0 %v1469
    %1750 = vmatprep.subr.bf16.mxu0 %v1473
    %1751 = vmatpush1.bf16.msra.mxu0 %v1472
    %1752 = vmatprep.subr.bf16.mxu0 %v1476
    %1753 = vmatpush1.bf16.msra.mxu0 %v1475
    %1754 = vmatprep.subr.bf16.mxu0 %v1479
    %1755 = vmatpush1.bf16.msra.mxu0 %v1478
    %1756 = vmatprep.subr.bf16.mxu0 %v1482
    %1757 = vmatpush1.bf16.msra.mxu0 %v1481
    %1758 = vmatprep.subr.bf16.mxu0 %v1485
    %1759 = vmatpush1.bf16.msra.mxu0 %v1484
    %1760 = vmatprep.subr.bf16.mxu0 %v1488
    %1761 = vmatpush1.bf16.msra.mxu0 %v1487
    %1762 = vmatprep.subr.bf16.mxu0 %v1491
    %1763 = vmatpush1.bf16.msra.mxu0 %v1490
    %1764 = vmatprep.subr.bf16.mxu0 %v1494
    %1765 = vmatpush1.bf16.msra.mxu0 %v1493
    %1766 = vmatprep.subr.bf16.mxu0 %v1497
    %1767 = vmatpush1.bf16.msra.mxu0 %v1496
    %1768 = vmatprep.subr.bf16.mxu0 %v1500
    %1769 = vmatpush1.bf16.msra.mxu0 %v1499
    %1770 = vmatprep.subr.bf16.mxu0 %v1503
    %1771 = vmatpush1.bf16.msra.mxu0 %v1502
    %1772 = vmatprep.subr.bf16.mxu0 %v1506
    %1773 = vmatpush1.bf16.msra.mxu0 %v1505
    %1774 = vmatprep.subr.bf16.mxu0 %v1509
    %1775 = vmatpush1.bf16.msra.mxu0 %v1508
    %1776 = vmatprep.mubr.bf16.mxu0 %v928
    %1777 = vmatmul.mubr.bf16.gmra.mrb[0].mxu0 %v927
    %v1778 = vpop.f32.mrb[0].mxu0
    %v1779 = vadd.f32 %v1738, %v1778
    %v1780 = vpop.f32.mrb[0].mxu0
    %v1781 = vadd.f32 %v1740, %v1780
    %v1782 = vpop.f32.mrb[0].mxu0
    %v1783 = vpop.f32.mrb[0].mxu0
    %1784 = vdwg.mxu0
    %1785 = vmatprep.subr.bf16.mxu0 %v1512
    %1786 = vmatpush1.bf16.msra.mxu0 %v1511
    %1787 = vmatprep.subr.bf16.mxu0 %v1515
    %1788 = vmatpush1.bf16.msra.mxu0 %v1514
    %1789 = vmatprep.subr.bf16.mxu0 %v1518
    %1790 = vmatpush1.bf16.msra.mxu0 %v1517
    %1791 = vmatprep.subr.bf16.mxu0 %v1521
    %1792 = vmatpush1.bf16.msra.mxu0 %v1520
    %1793 = vmatprep.subr.bf16.mxu0 %v1524
    %1794 = vmatpush1.bf16.msra.mxu0 %v1523
    %1795 = vmatprep.subr.bf16.mxu0 %v1527
    %1796 = vmatpush1.bf16.msra.mxu0 %v1526
    %1797 = vmatprep.subr.bf16.mxu0 %v1530
    %1798 = vmatpush1.bf16.msra.mxu0 %v1529
    %1799 = vmatprep.subr.bf16.mxu0 %v1533
    %1800 = vmatpush1.bf16.msra.mxu0 %v1532
    %1801 = vmatprep.subr.bf16.mxu0 %v1536
    %1802 = vmatpush1.bf16.msra.mxu0 %v1535
    %1803 = vmatprep.subr.bf16.mxu0 %v1539
    %1804 = vmatpush1.bf16.msra.mxu0 %v1538
    %1805 = vmatprep.subr.bf16.mxu0 %v1542
    %1806 = vmatpush1.bf16.msra.mxu0 %v1541
    %1807 = vmatprep.subr.bf16.mxu0 %v1545
    %1808 = vmatpush1.bf16.msra.mxu0 %v1544
    %1809 = vmatprep.subr.bf16.mxu0 %v1548
    %1810 = vmatpush1.bf16.msra.mxu0 %v1547
    %1811 = vmatprep.subr.bf16.mxu0 %v1551
    %1812 = vmatpush1.bf16.msra.mxu0 %v1550
    %1813 = vmatprep.subr.bf16.mxu0 %v1554
    %1814 = vmatpush1.bf16.msra.mxu0 %v1553
    %1815 = vmatprep.subr.bf16.mxu0 %v1557
    %1816 = vmatpush1.bf16.msra.mxu0 %v1556
    %1817 = vmatprep.mubr.bf16.mxu0 %v926
    %1818 = vmatmul.mubr.bf16.gmra.mrb[0].mxu0 %v912
    %v1819 = vpop.f32.mrb[0].mxu0
    %v1820 = vadd.f32 %v1779, %v1819
    %v1821 = vpop.f32.mrb[0].mxu0
    %v1822 = vadd.f32 %v1781, %v1821
    %v1823 = vpop.f32.mrb[0].mxu0
    %v1824 = vpop.f32.mrb[0].mxu0
    %1825 = vdwg.mxu0
    %1826 = vmatprep.subr.bf16.mxu0 0
    %1827 = vmatpush1.bf16.msra.mxu0 %v1417
    %1828 = vmatprep.subr.bf16.mxu0 0
    %1829 = vmatpush1.bf16.msra.mxu0 %v1420
    %1830 = vmatprep.subr.bf16.mxu0 0
    %1831 = vmatpush1.bf16.msra.mxu0 %v1423
    %1832 = vmatprep.subr.bf16.mxu0 0
    %1833 = vmatpush1.bf16.msra.mxu0 %v1426
    %1834 = vmatprep.subr.bf16.mxu0 0
    %1835 = vmatpush1.bf16.msra.mxu0 %v1429
    %1836 = vmatprep.subr.bf16.mxu0 0
    %1837 = vmatpush1.bf16.msra.mxu0 %v1432
    %1838 = vmatprep.subr.bf16.mxu0 0
    %1839 = vmatpush1.bf16.msra.mxu0 %v1435
    %1840 = vmatprep.subr.bf16.mxu0 0
    %1841 = vmatpush1.bf16.msra.mxu0 %v1438
    %1842 = vmatprep.subr.bf16.mxu0 0
    %1843 = vmatpush1.bf16.msra.mxu0 %v1441
    %1844 = vmatprep.subr.bf16.mxu0 0
    %1845 = vmatpush1.bf16.msra.mxu0 %v1444
    %1846 = vmatprep.subr.bf16.mxu0 0
    %1847 = vmatpush1.bf16.msra.mxu0 %v1447
    %1848 = vmatprep.subr.bf16.mxu0 0
    %1849 = vmatpush1.bf16.msra.mxu0 %v1450
    %1850 = vmatprep.subr.bf16.mxu0 0
    %1851 = vmatpush1.bf16.msra.mxu0 %v1453
    %1852 = vmatprep.subr.bf16.mxu0 0
    %1853 = vmatpush1.bf16.msra.mxu0 %v1456
    %1854 = vmatprep.subr.bf16.mxu0 0
    %1855 = vmatpush1.bf16.msra.mxu0 %v1459
    %1856 = vmatprep.subr.bf16.mxu0 0
    %1857 = vmatpush1.bf16.msra.mxu0 %v1462
    %1858 = vmatprep.mubr.bf16.mxu0 %v919
    %1859 = vmatmul.mubr.bf16.gmra.mrb[0].mxu0 %v905
    %v1860 = vpop.f32.mrb[0].mxu0
    %v1861 = vadd.f32 %v877, %v1860
    %v1862 = vpop.f32.mrb[0].mxu0
    %v1863 = vpop.f32.mrb[0].mxu0
    %v1864 = vpop.f32.mrb[0].mxu0
    %1865 = vdwg.mxu0
    %1866 = vmatprep.subr.bf16.mxu0 0
    %1867 = vmatpush1.bf16.msra.mxu0 %v1465
    %1868 = vmatprep.subr.bf16.mxu0 0
    %1869 = vmatpush1.bf16.msra.mxu0 %v1468
    %1870 = vmatprep.subr.bf16.mxu0 0
    %1871 = vmatpush1.bf16.msra.mxu0 %v1471
    %1872 = vmatprep.subr.bf16.mxu0 0
    %1873 = vmatpush1.bf16.msra.mxu0 %v1474
    %1874 = vmatprep.subr.bf16.mxu0 0
    %1875 = vmatpush1.bf16.msra.mxu0 %v1477
    %1876 = vmatprep.subr.bf16.mxu0 0
    %1877 = vmatpush1.bf16.msra.mxu0 %v1480
    %1878 = vmatprep.subr.bf16.mxu0 0
    %1879 = vmatpush1.bf16.msra.mxu0 %v1483
    %1880 = vmatprep.subr.bf16.mxu0 0
    %1881 = vmatpush1.bf16.msra.mxu0 %v1486
    %1882 = vmatprep.subr.bf16.mxu0 0
    %1883 = vmatpush1.bf16.msra.mxu0 %v1489
    %1884 = vmatprep.subr.bf16.mxu0 0
    %1885 = vmatpush1.bf16.msra.mxu0 %v1492
    %1886 = vmatprep.subr.bf16.mxu0 0
    %1887 = vmatpush1.bf16.msra.mxu0 %v1495
    %1888 = vmatprep.subr.bf16.mxu0 0
    %1889 = vmatpush1.bf16.msra.mxu0 %v1498
    %1890 = vmatprep.subr.bf16.mxu0 0
    %1891 = vmatpush1.bf16.msra.mxu0 %v1501
    %1892 = vmatprep.subr.bf16.mxu0 0
    %1893 = vmatpush1.bf16.msra.mxu0 %v1504
    %1894 = vmatprep.subr.bf16.mxu0 0
    %1895 = vmatpush1.bf16.msra.mxu0 %v1507
    %1896 = vmatprep.subr.bf16.mxu0 0
    %1897 = vmatpush1.bf16.msra.mxu0 %v1510
    %1898 = vmatprep.mubr.bf16.mxu0 %v928
    %1899 = vmatmul.mubr.bf16.gmra.mrb[0].mxu0 %v927
    %v1900 = vpop.f32.mrb[0].mxu0
    %v1901 = vadd.f32 %v1861, %v1900
    %v1902 = vpop.f32.mrb[0].mxu0
    %v1903 = vpop.f32.mrb[0].mxu0
    %v1904 = vpop.f32.mrb[0].mxu0
    %1905 = vdwg.mxu0
    %1906 = vmatprep.subr.bf16.mxu0 0
    %1907 = vmatpush1.bf16.msra.mxu0 %v1513
    %1908 = vmatprep.subr.bf16.mxu0 0
    %1909 = vmatpush1.bf16.msra.mxu0 %v1516
    %1910 = vmatprep.subr.bf16.mxu0 0
    %1911 = vmatpush1.bf16.msra.mxu0 %v1519
    %1912 = vmatprep.subr.bf16.mxu0 0
    %1913 = vmatpush1.bf16.msra.mxu0 %v1522
    %1914 = vmatprep.subr.bf16.mxu0 0
    %1915 = vmatpush1.bf16.msra.mxu0 %v1525
    %1916 = vmatprep.subr.bf16.mxu0 0
    %1917 = vmatpush1.bf16.msra.mxu0 %v1528
    %1918 = vmatprep.subr.bf16.mxu0 0
    %1919 = vmatpush1.bf16.msra.mxu0 %v1531
    %1920 = vmatprep.subr.bf16.mxu0 0
    %1921 = vmatpush1.bf16.msra.mxu0 %v1534
    %1922 = vmatprep.subr.bf16.mxu0 0
    %1923 = vmatpush1.bf16.msra.mxu0 %v1537
    %1924 = vmatprep.subr.bf16.mxu0 0
    %1925 = vmatpush1.bf16.msra.mxu0 %v1540
    %1926 = vmatprep.subr.bf16.mxu0 0
    %1927 = vmatpush1.bf16.msra.mxu0 %v1543
    %1928 = vmatprep.subr.bf16.mxu0 0
    %1929 = vmatpush1.bf16.msra.mxu0 %v1546
    %1930 = vmatprep.subr.bf16.mxu0 0
    %1931 = vmatpush1.bf16.msra.mxu0 %v1549
    %1932 = vmatprep.subr.bf16.mxu0 0
    %1933 = vmatpush1.bf16.msra.mxu0 %v1552
    %1934 = vmatprep.subr.bf16.mxu0 0
    %1935 = vmatpush1.bf16.msra.mxu0 %v1555
    %1936 = vmatprep.subr.bf16.mxu0 0
    %1937 = vmatpush1.bf16.msra.mxu0 %v1558
    %1938 = vmatprep.mubr.bf16.mxu0 %v926
    %1939 = vmatmul.mubr.bf16.gmra.mrb[0].mxu0 %v912
    %v1940 = vpop.f32.mrb[0].mxu0
    %v1941 = vadd.f32 %v1901, %v1940
    %v1942 = vpop.f32.mrb[0].mxu0
    %v1943 = vpop.f32.mrb[0].mxu0
    %v1944 = vpop.f32.mrb[0].mxu0
    %1945 = vdwg.mxu0
    %v1949 = vcombine.low %v1820, %v1822
    %v1951 = vunpack.c.l.s4 1983009808
    %v1952 = vunpack.c.0.s8 %v1951
    %v1953 = vlaneseq
    %v1954 = vshrl.u32 %v1953, 7
    %v1955 = vsub.s32 %v1952, %v1954
    %v1956 = vrot.slane %v1949, %v1955
    %v1958 = vunpack.c.l.s4 1983009808
    %v1959 = vunpack.c.0.s8 %v1958
    %v1960 = vlaneseq
    %v1961 = vshrl.u32 %v1960, 7
    %v1962 = vsub.s32 %v1959, %v1961
    %v1963 = vrot.slane %v1941, %v1962
    %v1964 = vcombine.low %v1956, %v1963
    %vm1966 = vcmask 1043458
    %vm1967 = vmor %vm1966, %vm510
    %vm1968 = vcmask 865284
    %vm1969 = vmor %vm1968, %vm1967
    %1970 = vst.msk [vmem:[#allocation3] sm:$0x3f] %vm1969, %v1964
    // Predicated region
    $region22: #{policy_head_forward.1} parent=1 // pred_check
      _
    $region23: #{policy_head_forward.1} parent=1 // pred_check_branch
      %1972 = sbr.rel (0) target = $region25
    $region24: #{policy_head_forward.1} parent=1 // pred_region
      %s1974 = ssub.s32 96, 96
      %1975 = vsyncadd [#allocation4], %s1974
      %s1977 = sshll.u32 [#allocation3], 4
      %s1978 = int_to_ptr.vmem [resolvable:$true] %s1977
      %1980 = dma.vmem_to_hbm [thread:$0]  %s1978, 96, %s5, [#allocation4]
    $region25: #{policy_head_forward.1} parent=1 // pred_fallthru
      _
    // Predicated region
    $region26: #{policy_head_forward.1} parent=1 // pred_check
      _
    $region27: #{policy_head_forward.1} parent=1 // pred_check_branch
      %1982 = sbr.rel (0) target = $region29
    $region28: #{policy_head_forward.1} parent=1 // pred_region
      %1983 = dma.done [#allocation4], 96
    $region29: #{policy_head_forward.1} parent=1 // pred_fallthru
      _
    %1984 = vsyncpa [#allocation4], 1

</llo_original>
